<compile_context>
chip_gen: v6e
topology: v6e:2x2x1
jax: 0.10.0
libtpu: 0.0.40
codegen_flags: <defaults>
</compile_context>

<pallas_src>
import jax
import jax.numpy as jnp
from jax.experimental import pallas as pl
from jax.experimental.pallas import tpu as pltpu


# ----------------------------------------------------------------------------
# Pallas kernel
# ----------------------------------------------------------------------------
def specmask_kernel(x_ref, w1_ref, b1_ref, w2_ref, b2_ref, e_ref,
                    w3_ref, b3_ref, w4_ref, b4_ref, out_ref):
    hd = out_ref.shape[1] // 2
    x = x_ref[...]                                        # (TN, 2KH) bf16, (k,h,re/im) layout

    # --- node_spec_map: Linear -> ReLU -> Linear (1/T folded into w2/b2) ------
    h1 = jnp.maximum(
        jnp.dot(x, w1_ref[...], preferred_element_type=jnp.float32) + b1_ref[...],
        0.0)                                              # (TN, 2H) f32
    logits = (jnp.dot(h1.astype(w2_ref.dtype), w2_ref[...],
                      preferred_element_type=jnp.float32)
              + b2_ref[...])                              # (TN, K) f32, already / T

    # --- soft mask (f32), broadcast K -> 2KH lane-dense via exact 0/1 matmul ---
    cmask = jax.nn.sigmoid(logits)                        # (TN, K) f32
    cmask_full = jnp.dot(cmask, e_ref[...],
                         preferred_element_type=jnp.float32)   # (TN, 2KH) f32

    c_in = x.astype(jnp.float32) * cmask_full             # f32 mask math
    # s_in = x * sigmoid(-z) = x - c_in  (never materialized; see identity below)

    # --- spec_lin (shared weights): s_in @ W3 = x @ W3 - c_in @ W3 -------------
    xw3 = jnp.dot(x, w3_ref[...], preferred_element_type=jnp.float32)          # (TN, 2H)
    cw3 = jnp.dot(c_in.astype(x.dtype), w3_ref[...],
                  preferred_element_type=jnp.float32)                          # (TN, 2H)
    h2_c = jnp.maximum(cw3 + b3_ref[...], 0.0)
    h2_s = jnp.maximum(xw3 - cw3 + b3_ref[...], 0.0)

    out_c = (jnp.dot(h2_c.astype(w4_ref.dtype), w4_ref[...],
                     preferred_element_type=jnp.float32) + b4_ref[...])        # (TN, H)
    out_s = (jnp.dot(h2_s.astype(w4_ref.dtype), w4_ref[...],
                     preferred_element_type=jnp.float32) + b4_ref[...])        # (TN, H)

    # static lane-slice stores (no sublane/lane repack concat)
    out_ref[:, :hd] = out_c.astype(out_ref.dtype)
    out_ref[:, hd:] = out_s.astype(out_ref.dtype)


# ----------------------------------------------------------------------------
# Wrapper
# ----------------------------------------------------------------------------
def _round_up(v, m):
    return ((v + m - 1) // m) * m


def spec_mask_forward(specs, params, *, temperature, k_len, hid_dim, tile_n=512):
    r = jnp.real(specs)                         # (N, K, H) f32
    im = jnp.imag(specs)                        # (N, K, H) f32
    n = r.shape[0]
    din = 2 * k_len * hid_dim

    # Single flat input in the NATIVE node_spec_map layout: (k, h, [re, im]).
    # (Complex bitcast is not supported in JAX, so a single stack+reshape pass.)
    x = jnp.stack([r, im], axis=-1).reshape(n, din).astype(jnp.bfloat16)

    w1, b1, w2, b2, w3, b3, w4, b4 = params

    # w1 stays native (x is already in its layout).  Permute w3 rows from the
    # spec_lin blocked layout (k, re/im, h) to the interleaved layout of x.
    perm = jnp.transpose(
        jnp.arange(din, dtype=jnp.int32).reshape(k_len, 2, hid_dim), (0, 2, 1)
    ).reshape(-1)
    w3p = w3[perm]

    # Fold 1/temperature into the second node_spec_map layer.
    inv_t = 1.0 / float(temperature)
    w2s = w2 * inv_t
    b2s = b2 * inv_t

    # bf16 matmul operands (f32 accumulation in-kernel), f32 biases.
    w1b = w1.astype(jnp.bfloat16)
    w2b = w2s.astype(jnp.bfloat16)
    w3b = w3p.astype(jnp.bfloat16)
    w4b = w4.astype(jnp.bfloat16)

    # K -> 2*K*H block-expansion (0/1) matrix, exact in f32.
    e = jnp.repeat(jnp.eye(k_len, dtype=jnp.float32), 2 * hid_dim, axis=1)  # (K, 2KH)

    # Batch tile: 16-sublane aligned (bf16 packing), capped at ~ceil(N/2) so the
    # grid has >= 2 tiles for moderate N (lets v7x shard across both TCs).
    SUB = 16
    n_al = max(SUB, _round_up(n, SUB))
    half = _round_up((n_al + 1) // 2, SUB)
    tn = min(max(SUB, (int(tile_n) // SUB) * SUB), half)
    n_pad = pl.cdiv(n, tn) * tn
    if n_pad != n:
        x = jnp.pad(x, ((0, n_pad - n), (0, 0)))

    def rep(a):  # whole-array (replicated) spec
        return pl.BlockSpec(a.shape, lambda i, nd=a.ndim: (0,) * nd)

    out = pl.pallas_call(
        specmask_kernel,
        out_shape=jax.ShapeDtypeStruct((n_pad, 2 * hid_dim), jnp.float32),
        grid_spec=pltpu.PrefetchScalarGridSpec(
            num_scalar_prefetch=0,
            grid=(n_pad // tn,),
            in_specs=[
                pl.BlockSpec((tn, din), lambda i: (i, 0)),
                rep(w1b), rep(b1), rep(w2b), rep(b2s), rep(e),
                rep(w3b), rep(b3), rep(w4b), rep(b4),
            ],
            out_specs=pl.BlockSpec((tn, 2 * hid_dim), lambda i: (i, 0)),
        ),
        compiler_params=pltpu.CompilerParams(
            dimension_semantics=("parallel",),
            vmem_limit_bytes=64 * 1024 * 1024,
        ),
    )(x, w1b, b1, w2b, b2s, e, w3b, b3, w4b, b4)

    return out[:n, :hid_dim], out[:n, hid_dim:]


# ----------------------------------------------------------------------------
# Parameter init (PyTorch nn.Linear default: U(-1/sqrt(fan_in), 1/sqrt(fan_in)))
# ----------------------------------------------------------------------------
def init_linear(key, fan_in, fan_out):
    kw, kb = jax.random.split(key)
    bound = 1.0 / float(fan_in) ** 0.5
    w = jax.random.uniform(kw, (fan_in, fan_out), jnp.float32, -bound, bound)
    b = jax.random.uniform(kb, (1, fan_out), jnp.float32, -bound, bound)
    return w, b


# ----------------------------------------------------------------------------
# Pure-JAX reference (faithful to the PyTorch module) for verification
# ----------------------------------------------------------------------------
def ref_forward(specs, params, *, temperature, k_len, hid_dim):
    r = jnp.real(specs).astype(jnp.float32)
    im = jnp.imag(specs).astype(jnp.float32)
    n = r.shape[0]
    w1, b1, w2, b2, w3, b3, w4, b4 = params
    hp = jax.lax.Precision.HIGHEST
    x_node = jnp.stack([r, im], -1).reshape(n, -1)      # interleaved layout
    h = jnp.maximum(jnp.dot(x_node, w1, precision=hp) + b1, 0.0)
    nc = jnp.dot(h, w2, precision=hp) + b2
    cm = jax.nn.sigmoid(nc / temperature)[:, :, None]
    sm = jax.nn.sigmoid(-nc / temperature)[:, :, None]
    c_in = jnp.concatenate([r * cm, im * cm], -1).reshape(n, -1)
    s_in = jnp.concatenate([r * sm, im * sm], -1).reshape(n, -1)
    co = jnp.dot(jnp.maximum(jnp.dot(c_in, w3, precision=hp) + b3, 0.0), w4,
                 precision=hp) + b4
    so = jnp.dot(jnp.maximum(jnp.dot(s_in, w3, precision=hp) + b3, 0.0), w4,
                 precision=hp) + b4
    return co, so


if __name__ == "__main__":
    hid_dim = 32
    k_len = 8
    temperature = 0.5
    n = 32  # batch of "nodes" -> 2 grid tiles at this size

    key = jax.random.PRNGKey(0)
    k_specs_r, k_specs_i, k1, k2, k3, k4 = jax.random.split(key, 6)

    specs = (jax.random.normal(k_specs_r, (n, k_len, hid_dim), jnp.float32)
             + 1j * jax.random.normal(k_specs_i, (n, k_len, hid_dim), jnp.float32)
             ).astype(jnp.complex64)

    din = k_len * hid_dim * 2
    w1, b1 = init_linear(k1, din, hid_dim * 2)          # node_spec_map layer 0
    w2, b2 = init_linear(k2, hid_dim * 2, k_len)        # node_spec_map layer 1
    w3, b3 = init_linear(k3, din, hid_dim * 2)          # spec_lin layer 0
    w4, b4 = init_linear(k4, hid_dim * 2, hid_dim)      # spec_lin layer 1
    params = (w1, b1, w2, b2, w3, b3, w4, b4)

    c_spec, s_spec = spec_mask_forward(
        specs, params, temperature=temperature, k_len=k_len, hid_dim=hid_dim)
    c_spec = jax.block_until_ready(c_spec)
    s_spec = jax.block_until_ready(s_spec)

    c_ref, s_ref = ref_forward(
        specs, params, temperature=temperature, k_len=k_len, hid_dim=hid_dim)

    assert c_spec.shape == (n, hid_dim) and s_spec.shape == (n, hid_dim)
    # bf16 matmul operands with f32 accumulation vs. f32 HIGHEST reference.
    assert jnp.allclose(c_spec, c_ref, rtol=2e-2, atol=2e-2)
    assert jnp.allclose(s_spec, s_ref, rtol=2e-2, atol=2e-2)

    print("KERNEL_OK")
</pallas_src>

<mosaic_0001>
module attributes {stable_mosaic.version = 11 : i64} {
  func.func @specmask_kernel(%arg0: i32, %arg1: memref<16x512xbf16, #tpu.memory_space<vmem>>, %arg2: memref<512x64xbf16, #tpu.memory_space<vmem>>, %arg3: memref<1x64xf32, #tpu.memory_space<vmem>>, %arg4: memref<64x8xbf16, #tpu.memory_space<vmem>>, %arg5: memref<1x8xf32, #tpu.memory_space<vmem>>, %arg6: memref<8x512xf32, #tpu.memory_space<vmem>>, %arg7: memref<512x64xbf16, #tpu.memory_space<vmem>>, %arg8: memref<1x64xf32, #tpu.memory_space<vmem>>, %arg9: memref<64x32xbf16, #tpu.memory_space<vmem>>, %arg10: memref<1x32xf32, #tpu.memory_space<vmem>>, %arg11: memref<16x64xf32, #tpu.memory_space<vmem>>) attributes {dimension_semantics = [#tpu.dimension_semantics<parallel>], iteration_bounds = array<i64: 2>, scalar_prefetch = 0 : i64, scratch_operands = 0 : i64, tpu.core_type = #tpu.core_type<tc>, window_params = [{transform_indices = @transform_0, window_bounds = array<i64: 16, 512>}, {pipeline_mode = #tpu.pipeline_mode<synchronous>, transform_indices = @transform_1, window_bounds = array<i64: 512, 64>}, {pipeline_mode = #tpu.pipeline_mode<synchronous>, transform_indices = @transform_2, window_bounds = array<i64: 1, 64>}, {pipeline_mode = #tpu.pipeline_mode<synchronous>, transform_indices = @transform_3, window_bounds = array<i64: 64, 8>}, {pipeline_mode = #tpu.pipeline_mode<synchronous>, transform_indices = @transform_4, window_bounds = array<i64: 1, 8>}, {pipeline_mode = #tpu.pipeline_mode<synchronous>, transform_indices = @transform_5, window_bounds = array<i64: 8, 512>}, {pipeline_mode = #tpu.pipeline_mode<synchronous>, transform_indices = @transform_6, window_bounds = array<i64: 512, 64>}, {pipeline_mode = #tpu.pipeline_mode<synchronous>, transform_indices = @transform_7, window_bounds = array<i64: 1, 64>}, {pipeline_mode = #tpu.pipeline_mode<synchronous>, transform_indices = @transform_8, window_bounds = array<i64: 64, 32>}, {pipeline_mode = #tpu.pipeline_mode<synchronous>, transform_indices = @transform_9, window_bounds = array<i64: 1, 32>}, {transform_indices = @transform_10, window_bounds = array<i64: 16, 64>}]} {
    %c0 = arith.constant 0 : index
    %c0_0 = arith.constant 0 : index
    %0 = vector.load %arg1[%c0, %c0_0] : memref<16x512xbf16, #tpu.memory_space<vmem>>, vector<16x512xbf16>
    %c0_1 = arith.constant 0 : index
    %c0_2 = arith.constant 0 : index
    %1 = vector.load %arg2[%c0_1, %c0_2] : memref<512x64xbf16, #tpu.memory_space<vmem>>, vector<512x64xbf16>
    %cst = arith.constant dense<0.000000e+00> : vector<16x64xf32>
    %2 = tpu.matmul %0, %1, %cst {dimension_numbers = #tpu.dot_dimension_numbers<[1], [0], [0], [1], [0, 0, 1, 1], [], []>} : vector<16x512xbf16>, vector<512x64xbf16>, vector<16x64xf32> -> vector<16x64xf32>
    %c0_3 = arith.constant 0 : index
    %c0_4 = arith.constant 0 : index
    %3 = vector.load %arg3[%c0_3, %c0_4] : memref<1x64xf32, #tpu.memory_space<vmem>>, vector<1x64xf32>
    %4 = vector.broadcast %3 : vector<1x64xf32> to vector<16x64xf32>
    %5 = arith.addf %2, %4 : vector<16x64xf32>
    %cst_5 = arith.constant 0.000000e+00 : f32
    %6 = vector.broadcast %cst_5 : f32 to vector<16x64xf32>
    %7 = arith.maximumf %5, %6 : vector<16x64xf32>
    %8 = arith.truncf %7 : vector<16x64xf32> to vector<16x64xbf16>
    %c0_6 = arith.constant 0 : index
    %c0_7 = arith.constant 0 : index
    %9 = vector.load %arg4[%c0_6, %c0_7] : memref<64x8xbf16, #tpu.memory_space<vmem>>, vector<64x8xbf16>
    %cst_8 = arith.constant dense<0.000000e+00> : vector<16x8xf32>
    %10 = tpu.matmul %8, %9, %cst_8 {dimension_numbers = #tpu.dot_dimension_numbers<[1], [0], [0], [1], [0, 0, 1, 1], [], []>} : vector<16x64xbf16>, vector<64x8xbf16>, vector<16x8xf32> -> vector<16x8xf32>
    %c0_9 = arith.constant 0 : index
    %c0_10 = arith.constant 0 : index
    %11 = vector.load %arg5[%c0_9, %c0_10] : memref<1x8xf32, #tpu.memory_space<vmem>>, vector<1x8xf32>
    %12 = vector.broadcast %11 : vector<1x8xf32> to vector<16x8xf32>
    %13 = arith.addf %10, %12 : vector<16x8xf32>
    %14 = arith.negf %13 : vector<16x8xf32>
    %15 = math.exp %14 : vector<16x8xf32>
    %cst_11 = arith.constant 1.000000e+00 : f32
    %16 = vector.broadcast %cst_11 : f32 to vector<16x8xf32>
    %17 = arith.addf %16, %15 : vector<16x8xf32>
    %18 = arith.divf %16, %17 : vector<16x8xf32>
    %c0_12 = arith.constant 0 : index
    %c0_13 = arith.constant 0 : index
    %19 = vector.load %arg6[%c0_12, %c0_13] : memref<8x512xf32, #tpu.memory_space<vmem>>, vector<8x512xf32>
    %cst_14 = arith.constant dense<0.000000e+00> : vector<16x512xf32>
    %20 = tpu.matmul %18, %19, %cst_14 {dimension_numbers = #tpu.dot_dimension_numbers<[1], [0], [0], [1], [0, 0, 1, 1], [], []>} : vector<16x8xf32>, vector<8x512xf32>, vector<16x512xf32> -> vector<16x512xf32>
    %21 = arith.extf %0 : vector<16x512xbf16> to vector<16x512xf32>
    %22 = arith.mulf %21, %20 : vector<16x512xf32>
    %c0_15 = arith.constant 0 : index
    %c0_16 = arith.constant 0 : index
    %23 = vector.load %arg7[%c0_15, %c0_16] : memref<512x64xbf16, #tpu.memory_space<vmem>>, vector<512x64xbf16>
    %cst_17 = arith.constant dense<0.000000e+00> : vector<16x64xf32>
    %24 = tpu.matmul %0, %23, %cst_17 {dimension_numbers = #tpu.dot_dimension_numbers<[1], [0], [0], [1], [0, 0, 1, 1], [], []>} : vector<16x512xbf16>, vector<512x64xbf16>, vector<16x64xf32> -> vector<16x64xf32>
    %25 = arith.truncf %22 : vector<16x512xf32> to vector<16x512xbf16>
    %c0_18 = arith.constant 0 : index
    %c0_19 = arith.constant 0 : index
    %26 = vector.load %arg7[%c0_18, %c0_19] : memref<512x64xbf16, #tpu.memory_space<vmem>>, vector<512x64xbf16>
    %cst_20 = arith.constant dense<0.000000e+00> : vector<16x64xf32>
    %27 = tpu.matmul %25, %26, %cst_20 {dimension_numbers = #tpu.dot_dimension_numbers<[1], [0], [0], [1], [0, 0, 1, 1], [], []>} : vector<16x512xbf16>, vector<512x64xbf16>, vector<16x64xf32> -> vector<16x64xf32>
    %c0_21 = arith.constant 0 : index
    %c0_22 = arith.constant 0 : index
    %28 = vector.load %arg8[%c0_21, %c0_22] : memref<1x64xf32, #tpu.memory_space<vmem>>, vector<1x64xf32>
    %29 = vector.broadcast %28 : vector<1x64xf32> to vector<16x64xf32>
    %30 = arith.addf %27, %29 : vector<16x64xf32>
    %cst_23 = arith.constant 0.000000e+00 : f32
    %31 = vector.broadcast %cst_23 : f32 to vector<16x64xf32>
    %32 = arith.maximumf %30, %31 : vector<16x64xf32>
    %33 = arith.subf %24, %27 : vector<16x64xf32>
    %c0_24 = arith.constant 0 : index
    %c0_25 = arith.constant 0 : index
    %34 = vector.load %arg8[%c0_24, %c0_25] : memref<1x64xf32, #tpu.memory_space<vmem>>, vector<1x64xf32>
    %35 = vector.broadcast %34 : vector<1x64xf32> to vector<16x64xf32>
    %36 = arith.addf %33, %35 : vector<16x64xf32>
    %cst_26 = arith.constant 0.000000e+00 : f32
    %37 = vector.broadcast %cst_26 : f32 to vector<16x64xf32>
    %38 = arith.maximumf %36, %37 : vector<16x64xf32>
    %39 = arith.truncf %32 : vector<16x64xf32> to vector<16x64xbf16>
    %c0_27 = arith.constant 0 : index
    %c0_28 = arith.constant 0 : index
    %40 = vector.load %arg9[%c0_27, %c0_28] : memref<64x32xbf16, #tpu.memory_space<vmem>>, vector<64x32xbf16>
    %cst_29 = arith.constant dense<0.000000e+00> : vector<16x32xf32>
    %41 = tpu.matmul %39, %40, %cst_29 {dimension_numbers = #tpu.dot_dimension_numbers<[1], [0], [0], [1], [0, 0, 1, 1], [], []>} : vector<16x64xbf16>, vector<64x32xbf16>, vector<16x32xf32> -> vector<16x32xf32>
    %c0_30 = arith.constant 0 : index
    %c0_31 = arith.constant 0 : index
    %42 = vector.load %arg10[%c0_30, %c0_31] : memref<1x32xf32, #tpu.memory_space<vmem>>, vector<1x32xf32>
    %43 = vector.broadcast %42 : vector<1x32xf32> to vector<16x32xf32>
    %44 = arith.addf %41, %43 : vector<16x32xf32>
    %45 = arith.truncf %38 : vector<16x64xf32> to vector<16x64xbf16>
    %c0_32 = arith.constant 0 : index
    %c0_33 = arith.constant 0 : index
    %46 = vector.load %arg9[%c0_32, %c0_33] : memref<64x32xbf16, #tpu.memory_space<vmem>>, vector<64x32xbf16>
    %cst_34 = arith.constant dense<0.000000e+00> : vector<16x32xf32>
    %47 = tpu.matmul %45, %46, %cst_34 {dimension_numbers = #tpu.dot_dimension_numbers<[1], [0], [0], [1], [0, 0, 1, 1], [], []>} : vector<16x64xbf16>, vector<64x32xbf16>, vector<16x32xf32> -> vector<16x32xf32>
    %c0_35 = arith.constant 0 : index
    %c0_36 = arith.constant 0 : index
    %48 = vector.load %arg10[%c0_35, %c0_36] : memref<1x32xf32, #tpu.memory_space<vmem>>, vector<1x32xf32>
    %49 = vector.broadcast %48 : vector<1x32xf32> to vector<16x32xf32>
    %50 = arith.addf %47, %49 : vector<16x32xf32>
    %c0_37 = arith.constant 0 : index
    %c0_38 = arith.constant 0 : index
    %51 = vector.load %arg11[%c0_37, %c0_38] : memref<16x64xf32, #tpu.memory_space<vmem>>, vector<16x32xf32>
    tpu.vector_store %arg11[%c0_37, %c0_38], %44 {strides = array<i32>} : memref<16x64xf32, #tpu.memory_space<vmem>>, vector<16x32xf32>,
    %c0_39 = arith.constant 0 : index
    %c32 = arith.constant 32 : index
    %52 = vector.load %arg11[%c0_39, %c32] : memref<16x64xf32, #tpu.memory_space<vmem>>, vector<16x32xf32>
    tpu.vector_store %arg11[%c0_39, %c32], %50 {strides = array<i32>} : memref<16x64xf32, #tpu.memory_space<vmem>>, vector<16x32xf32>,
    return
  }
  func.func @transform_0(%arg0: i32) -> (i32, i32) {
    %c0_i32 = arith.constant 0 : i32
    %c0_i32_0 = arith.constant 0 : i32
    return %arg0, %c0_i32 : i32, i32
  }
  func.func @transform_1(%arg0: i32) -> (i32, i32) {
    %c0_i32 = arith.constant 0 : i32
    %c0_i32_0 = arith.constant 0 : i32
    %c0_i32_1 = arith.constant 0 : i32
    return %c0_i32, %c0_i32_0 : i32, i32
  }
  func.func @transform_2(%arg0: i32) -> (i32, i32) {
    %c0_i32 = arith.constant 0 : i32
    %c0_i32_0 = arith.constant 0 : i32
    %c0_i32_1 = arith.constant 0 : i32
    return %c0_i32, %c0_i32_0 : i32, i32
  }
  func.func @transform_3(%arg0: i32) -> (i32, i32) {
    %c0_i32 = arith.constant 0 : i32
    %c0_i32_0 = arith.constant 0 : i32
    %c0_i32_1 = arith.constant 0 : i32
    return %c0_i32, %c0_i32_0 : i32, i32
  }
  func.func @transform_4(%arg0: i32) -> (i32, i32) {
    %c0_i32 = arith.constant 0 : i32
    %c0_i32_0 = arith.constant 0 : i32
    %c0_i32_1 = arith.constant 0 : i32
    return %c0_i32, %c0_i32_0 : i32, i32
  }
  func.func @transform_5(%arg0: i32) -> (i32, i32) {
    %c0_i32 = arith.constant 0 : i32
    %c0_i32_0 = arith.constant 0 : i32
    %c0_i32_1 = arith.constant 0 : i32
    return %c0_i32, %c0_i32_0 : i32, i32
  }
  func.func @transform_6(%arg0: i32) -> (i32, i32) {
    %c0_i32 = arith.constant 0 : i32
    %c0_i32_0 = arith.constant 0 : i32
    %c0_i32_1 = arith.constant 0 : i32
    return %c0_i32, %c0_i32_0 : i32, i32
  }
  func.func @transform_7(%arg0: i32) -> (i32, i32) {
    %c0_i32 = arith.constant 0 : i32
    %c0_i32_0 = arith.constant 0 : i32
    %c0_i32_1 = arith.constant 0 : i32
    return %c0_i32, %c0_i32_0 : i32, i32
  }
  func.func @transform_8(%arg0: i32) -> (i32, i32) {
    %c0_i32 = arith.constant 0 : i32
    %c0_i32_0 = arith.constant 0 : i32
    %c0_i32_1 = arith.constant 0 : i32
    return %c0_i32, %c0_i32_0 : i32, i32
  }
  func.func @transform_9(%arg0: i32) -> (i32, i32) {
    %c0_i32 = arith.constant 0 : i32
    %c0_i32_0 = arith.constant 0 : i32
    %c0_i32_1 = arith.constant 0 : i32
    return %c0_i32, %c0_i32_0 : i32, i32
  }
  func.func @transform_10(%arg0: i32) -> (i32, i32) {
    %c0_i32 = arith.constant 0 : i32
    %c0_i32_0 = arith.constant 0 : i32
    return %arg0, %c0_i32 : i32, i32
  }
}

</mosaic_0001>

<llo_original>
// kernel: tpu_custom_call.1
$region0: #{tpu_custom_call.1}
  #allocation0 [shape = 'u32[]', space=smem, size = 0x4, offset = 0x4, fixed_abs, tag = 'smem constant byte address 0x4 - core index']
  #allocation1 [shape = 'u32[144,128]{1,0:T(1,128)}', space=vmem, size = 0x12000, scoped, tag = 'internal scratch']
  %s0 = inlined_call_operand.vmem [shape: bf16[32,512], index: 0, kind: input, shape index: {}]
  %s1 = inlined_call_operand.vmem [shape: bf16[512,64], index: 1, kind: input, shape index: {}]
  %s2 = inlined_call_operand.vmem [shape: f32[1,64], index: 2, kind: input, shape index: {}]
  %s3 = inlined_call_operand.vmem [shape: bf16[64,8], index: 3, kind: input, shape index: {}]
  %s4 = inlined_call_operand.vmem [shape: f32[1,8], index: 4, kind: input, shape index: {}]
  %s5 = inlined_call_operand.vmem [shape: f32[8,512], index: 5, kind: input, shape index: {}]
  %s6 = inlined_call_operand.vmem [shape: bf16[512,64], index: 6, kind: input, shape index: {}]
  %s7 = inlined_call_operand.vmem [shape: f32[1,64], index: 7, kind: input, shape index: {}]
  %s8 = inlined_call_operand.vmem [shape: bf16[64,32], index: 8, kind: input, shape index: {}]
  %s9 = inlined_call_operand.vmem [shape: f32[1,32], index: 9, kind: input, shape index: {}]
  %s10 = inlined_call_operand.hbm [shape: f32[32,64], index: 10, kind: output, shape index: {}]
  %s11 = sld [smem:[#allocation0]]
  $region73: #{tpu_custom_call.1} parent=0
    _
  %s13 = ssub.s32 1, %s11
  %s14 = scalar_select 0, %s13, %s11
  $region1: #{tpu_custom_call.1} parent=0
    #allocation2 [shape = 'u8[16384]{0}', space=vmem, size = 0x4000, scoped, tag = 'output window, operand 0']
    #allocation3 [shape = 's32[2]{0}', space=sflag, size = 0x8, scoped, tag = 'scoped memory for tpu_custom_call.1']
    %15 = vsyncpa [#allocation3], 0
    %s16 = scalar_lea.sflag [#allocation3], 1
    %17 = vsyncpa %s16, 0
    loop: start=0, step=1, limit=4
    $region2: #{tpu_custom_call.1} parent=1 // loop_pre_header
      _
    $region3: #{tpu_custom_call.1} parent=1 // loop_header
      %s19 = sphi 0, %s23
      %p20 = scmp.ge.s32.totalorder %s19, 4
      %s29 = sphi 0, %s31
      %s32 = sphi 0, %s29
      %s33 = sphi 0, %s32
      %s49 = sphi 0, %s33
      %s53 = sphi 0, %s53
      %s55 = sphi 0, %s53
      %s56 = sphi 0, %s55
      %s70 = sphi 0, %s56
      %s74 = sphi 0, %s74
      %s76 = sphi 0, %s74
      %s77 = sphi 0, %s76
      %s91 = sphi 0, %s77
      %s95 = sphi 0, %s95
      %s97 = sphi 0, %s95
      %s98 = sphi 0, %s97
      %s112 = sphi 0, %s98
      %s116 = sphi 0, %s116
      %s118 = sphi 0, %s116
      %s119 = sphi 0, %s118
      %s133 = sphi 0, %s119
      %s137 = sphi 0, %s137
      %s139 = sphi 0, %s137
      %s140 = sphi 0, %s139
      %s154 = sphi 0, %s140
      %s158 = sphi 0, %s158
      %s160 = sphi 0, %s158
      %s161 = sphi 0, %s160
      %s175 = sphi 0, %s161
      %s179 = sphi 0, %s179
      %s181 = sphi 0, %s179
      %s182 = sphi 0, %s181
      %s196 = sphi 0, %s182
      %s200 = sphi 0, %s200
      %s202 = sphi 0, %s200
      %s203 = sphi 0, %s202
      %s217 = sphi 0, %s203
      %s221 = sphi 0, %s221
      %s223 = sphi 0, %s221
      %s224 = sphi 0, %s223
      %s238 = sphi 0, %s224
      %s244 = sphi 0, %s246
      %s247 = sphi 0, %s244
      %s248 = sphi 0, %s247
      %s264 = sphi 0, %s248
    $region4: #{tpu_custom_call.1} parent=1 // loop_header_branch
      %22 = sbr.rel (%p20) target = $region8
    $region5: #{tpu_custom_call.1} parent=1 // loop_body
      %s24 = ssub.s32 %s19, 1
      %s25 = ssub.s32 %s19, 2
      %s26 = sadd.s32 %s19, 1
      %s27 = ssub.s32 %s19, %s26
      %p28 = scmp.eq.s32.totalorder %s27, 0
      %s30 = sadd.s32 %s29, 1
      %s31 = scalar_select %p28, %s29, %s30
      %p34 = pneg %p28
      %p35 = scmp.eq.s32.totalorder %s19, 1
      %p36 = por %p34, %p35
      %p37 = scmp.ne.s32.totalorder %s29, %s32
      %p38 = scmp.eq.s32.totalorder %s19, 0
      %p39 = por %p37, %p38
      %p40 = scmp.ne.s32.totalorder %s29, %s32
      %p41 = scmp.eq.s32.totalorder %s24, 1
      %p42 = por %p40, %p41
      %p43 = scmp.ne.s32.totalorder %s32, %s33
      %p44 = scmp.eq.s32.totalorder %s24, 0
      %p45 = por %p43, %p44
      %p46 = scmp.ne.s32.totalorder %s32, %s33
      %p47 = scmp.eq.s32.totalorder %s25, 1
      %p48 = por %p46, %p47
      %p50 = scmp.ne.s32.totalorder %s33, %s49
      %p51 = scmp.eq.s32.totalorder %s25, 0
      %p52 = por %p50, %p51
      %s54 = sadd.s32 %s53, 1
      %p57 = scmp.eq.s32.totalorder %s19, 1
      %p58 = scmp.ne.s32.totalorder %s53, %s55
      %p59 = scmp.eq.s32.totalorder %s19, 0
      %p60 = por %p58, %p59
      %p61 = scmp.ne.s32.totalorder %s53, %s55
      %p62 = scmp.eq.s32.totalorder %s24, 1
      %p63 = por %p61, %p62
      %p64 = scmp.ne.s32.totalorder %s55, %s56
      %p65 = scmp.eq.s32.totalorder %s24, 0
      %p66 = por %p64, %p65
      %p67 = scmp.ne.s32.totalorder %s55, %s56
      %p68 = scmp.eq.s32.totalorder %s25, 1
      %p69 = por %p67, %p68
      %p71 = scmp.ne.s32.totalorder %s56, %s70
      %p72 = scmp.eq.s32.totalorder %s25, 0
      %p73 = por %p71, %p72
      %s75 = sadd.s32 %s74, 1
      %p78 = scmp.eq.s32.totalorder %s19, 1
      %p79 = scmp.ne.s32.totalorder %s74, %s76
      %p80 = scmp.eq.s32.totalorder %s19, 0
      %p81 = por %p79, %p80
      %p82 = scmp.ne.s32.totalorder %s74, %s76
      %p83 = scmp.eq.s32.totalorder %s24, 1
      %p84 = por %p82, %p83
      %p85 = scmp.ne.s32.totalorder %s76, %s77
      %p86 = scmp.eq.s32.totalorder %s24, 0
      %p87 = por %p85, %p86
      %p88 = scmp.ne.s32.totalorder %s76, %s77
      %p89 = scmp.eq.s32.totalorder %s25, 1
      %p90 = por %p88, %p89
      %p92 = scmp.ne.s32.totalorder %s77, %s91
      %p93 = scmp.eq.s32.totalorder %s25, 0
      %p94 = por %p92, %p93
      %s96 = sadd.s32 %s95, 1
      %p99 = scmp.eq.s32.totalorder %s19, 1
      %p100 = scmp.ne.s32.totalorder %s95, %s97
      %p101 = scmp.eq.s32.totalorder %s19, 0
      %p102 = por %p100, %p101
      %p103 = scmp.ne.s32.totalorder %s95, %s97
      %p104 = scmp.eq.s32.totalorder %s24, 1
      %p105 = por %p103, %p104
      %p106 = scmp.ne.s32.totalorder %s97, %s98
      %p107 = scmp.eq.s32.totalorder %s24, 0
      %p108 = por %p106, %p107
      %p109 = scmp.ne.s32.totalorder %s97, %s98
      %p110 = scmp.eq.s32.totalorder %s25, 1
      %p111 = por %p109, %p110
      %p113 = scmp.ne.s32.totalorder %s98, %s112
      %p114 = scmp.eq.s32.totalorder %s25, 0
      %p115 = por %p113, %p114
      %s117 = sadd.s32 %s116, 1
      %p120 = scmp.eq.s32.totalorder %s19, 1
      %p121 = scmp.ne.s32.totalorder %s116, %s118
      %p122 = scmp.eq.s32.totalorder %s19, 0
      %p123 = por %p121, %p122
      %p124 = scmp.ne.s32.totalorder %s116, %s118
      %p125 = scmp.eq.s32.totalorder %s24, 1
      %p126 = por %p124, %p125
      %p127 = scmp.ne.s32.totalorder %s118, %s119
      %p128 = scmp.eq.s32.totalorder %s24, 0
      %p129 = por %p127, %p128
      %p130 = scmp.ne.s32.totalorder %s118, %s119
      %p131 = scmp.eq.s32.totalorder %s25, 1
      %p132 = por %p130, %p131
      %p134 = scmp.ne.s32.totalorder %s119, %s133
      %p135 = scmp.eq.s32.totalorder %s25, 0
      %p136 = por %p134, %p135
      %s138 = sadd.s32 %s137, 1
      %p141 = scmp.eq.s32.totalorder %s19, 1
      %p142 = scmp.ne.s32.totalorder %s137, %s139
      %p143 = scmp.eq.s32.totalorder %s19, 0
      %p144 = por %p142, %p143
      %p145 = scmp.ne.s32.totalorder %s137, %s139
      %p146 = scmp.eq.s32.totalorder %s24, 1
      %p147 = por %p145, %p146
      %p148 = scmp.ne.s32.totalorder %s139, %s140
      %p149 = scmp.eq.s32.totalorder %s24, 0
      %p150 = por %p148, %p149
      %p151 = scmp.ne.s32.totalorder %s139, %s140
      %p152 = scmp.eq.s32.totalorder %s25, 1
      %p153 = por %p151, %p152
      %p155 = scmp.ne.s32.totalorder %s140, %s154
      %p156 = scmp.eq.s32.totalorder %s25, 0
      %p157 = por %p155, %p156
      %s159 = sadd.s32 %s158, 1
      %p162 = scmp.eq.s32.totalorder %s19, 1
      %p163 = scmp.ne.s32.totalorder %s158, %s160
      %p164 = scmp.eq.s32.totalorder %s19, 0
      %p165 = por %p163, %p164
      %p166 = scmp.ne.s32.totalorder %s158, %s160
      %p167 = scmp.eq.s32.totalorder %s24, 1
      %p168 = por %p166, %p167
      %p169 = scmp.ne.s32.totalorder %s160, %s161
      %p170 = scmp.eq.s32.totalorder %s24, 0
      %p171 = por %p169, %p170
      %p172 = scmp.ne.s32.totalorder %s160, %s161
      %p173 = scmp.eq.s32.totalorder %s25, 1
      %p174 = por %p172, %p173
      %p176 = scmp.ne.s32.totalorder %s161, %s175
      %p177 = scmp.eq.s32.totalorder %s25, 0
      %p178 = por %p176, %p177
      %s180 = sadd.s32 %s179, 1
      %p183 = scmp.eq.s32.totalorder %s19, 1
      %p184 = scmp.ne.s32.totalorder %s179, %s181
      %p185 = scmp.eq.s32.totalorder %s19, 0
      %p186 = por %p184, %p185
      %p187 = scmp.ne.s32.totalorder %s179, %s181
      %p188 = scmp.eq.s32.totalorder %s24, 1
      %p189 = por %p187, %p188
      %p190 = scmp.ne.s32.totalorder %s181, %s182
      %p191 = scmp.eq.s32.totalorder %s24, 0
      %p192 = por %p190, %p191
      %p193 = scmp.ne.s32.totalorder %s181, %s182
      %p194 = scmp.eq.s32.totalorder %s25, 1
      %p195 = por %p193, %p194
      %p197 = scmp.ne.s32.totalorder %s182, %s196
      %p198 = scmp.eq.s32.totalorder %s25, 0
      %p199 = por %p197, %p198
      %s201 = sadd.s32 %s200, 1
      %p204 = scmp.eq.s32.totalorder %s19, 1
      %p205 = scmp.ne.s32.totalorder %s200, %s202
      %p206 = scmp.eq.s32.totalorder %s19, 0
      %p207 = por %p205, %p206
      %p208 = scmp.ne.s32.totalorder %s200, %s202
      %p209 = scmp.eq.s32.totalorder %s24, 1
      %p210 = por %p208, %p209
      %p211 = scmp.ne.s32.totalorder %s202, %s203
      %p212 = scmp.eq.s32.totalorder %s24, 0
      %p213 = por %p211, %p212
      %p214 = scmp.ne.s32.totalorder %s202, %s203
      %p215 = scmp.eq.s32.totalorder %s25, 1
      %p216 = por %p214, %p215
      %p218 = scmp.ne.s32.totalorder %s203, %s217
      %p219 = scmp.eq.s32.totalorder %s25, 0
      %p220 = por %p218, %p219
      %s222 = sadd.s32 %s221, 1
      %p225 = scmp.eq.s32.totalorder %s19, 1
      %p226 = scmp.ne.s32.totalorder %s221, %s223
      %p227 = scmp.eq.s32.totalorder %s19, 0
      %p228 = por %p226, %p227
      %p229 = scmp.ne.s32.totalorder %s221, %s223
      %p230 = scmp.eq.s32.totalorder %s24, 1
      %p231 = por %p229, %p230
      %p232 = scmp.ne.s32.totalorder %s223, %s224
      %p233 = scmp.eq.s32.totalorder %s24, 0
      %p234 = por %p232, %p233
      %p235 = scmp.ne.s32.totalorder %s223, %s224
      %p236 = scmp.eq.s32.totalorder %s25, 1
      %p237 = por %p235, %p236
      %p239 = scmp.ne.s32.totalorder %s224, %s238
      %p240 = scmp.eq.s32.totalorder %s25, 0
      %p241 = por %p239, %p240
      %s242 = ssub.s32 %s19, %s26
      %p243 = scmp.eq.s32.totalorder %s242, 0
      %s245 = sadd.s32 %s244, 1
      %s246 = scalar_select %p243, %s244, %s245
      %p249 = pneg %p243
      %p250 = scmp.eq.s32.totalorder %s19, 1
      %p251 = por %p249, %p250
      %p252 = scmp.ne.s32.totalorder %s244, %s247
      %p253 = scmp.eq.s32.totalorder %s19, 0
      %p254 = por %p252, %p253
      %p255 = scmp.ne.s32.totalorder %s244, %s247
      %p256 = scmp.eq.s32.totalorder %s24, 1
      %p257 = por %p255, %p256
      %p258 = scmp.ne.s32.totalorder %s247, %s248
      %p259 = scmp.eq.s32.totalorder %s24, 0
      %p260 = por %p258, %p259
      %p261 = scmp.ne.s32.totalorder %s247, %s248
      %p262 = scmp.eq.s32.totalorder %s25, 1
      %p263 = por %p261, %p262
      %p265 = scmp.ne.s32.totalorder %s248, %s264
      %p266 = scmp.eq.s32.totalorder %s25, 0
      %p267 = por %p265, %p266
      %p268 = scmp.le.s32.totalorder 1, %s19
      %p269 = scmp.lt.s32.totalorder %s19, 3
      %p270 = pnand %p268, %p269
      %p271 = pneg %p270
      // Predicated region
      $region9: #{tpu_custom_call.1} parent=5 // pred_check
        _
      $region10: #{tpu_custom_call.1} parent=5 // pred_check_branch
        %273 = sbr.rel (%p270) target = $region12
      $region11: #{tpu_custom_call.1} parent=5 // pred_region
        %s274 = ssub.s32 %s19, 1
        // Predicated region
        $region13: #{tpu_custom_call.1} parent=11 // pred_check
          %p275 = pneg %p66
        $region14: #{tpu_custom_call.1} parent=11 // pred_check_branch
          %277 = sbr.rel (%p275) target = $region16
        $region15: #{tpu_custom_call.1} parent=11 // pred_region
          _
        $region16: #{tpu_custom_call.1} parent=11 // pred_fallthru
          _
        // Predicated region
        $region17: #{tpu_custom_call.1} parent=11 // pred_check
          %p278 = pneg %p87
        $region18: #{tpu_custom_call.1} parent=11 // pred_check_branch
          %280 = sbr.rel (%p278) target = $region20
        $region19: #{tpu_custom_call.1} parent=11 // pred_region
          _
        $region20: #{tpu_custom_call.1} parent=11 // pred_fallthru
          _
        // Predicated region
        $region21: #{tpu_custom_call.1} parent=11 // pred_check
          %p281 = pneg %p108
        $region22: #{tpu_custom_call.1} parent=11 // pred_check_branch
          %283 = sbr.rel (%p281) target = $region24
        $region23: #{tpu_custom_call.1} parent=11 // pred_region
          _
        $region24: #{tpu_custom_call.1} parent=11 // pred_fallthru
          _
        // Predicated region
        $region25: #{tpu_custom_call.1} parent=11 // pred_check
          %p284 = pneg %p129
        $region26: #{tpu_custom_call.1} parent=11 // pred_check_branch
          %286 = sbr.rel (%p284) target = $region28
        $region27: #{tpu_custom_call.1} parent=11 // pred_region
          _
        $region28: #{tpu_custom_call.1} parent=11 // pred_fallthru
          _
        // Predicated region
        $region29: #{tpu_custom_call.1} parent=11 // pred_check
          %p287 = pneg %p150
        $region30: #{tpu_custom_call.1} parent=11 // pred_check_branch
          %289 = sbr.rel (%p287) target = $region32
        $region31: #{tpu_custom_call.1} parent=11 // pred_region
          _
        $region32: #{tpu_custom_call.1} parent=11 // pred_fallthru
          _
        // Predicated region
        $region33: #{tpu_custom_call.1} parent=11 // pred_check
          %p290 = pneg %p171
        $region34: #{tpu_custom_call.1} parent=11 // pred_check_branch
          %292 = sbr.rel (%p290) target = $region36
        $region35: #{tpu_custom_call.1} parent=11 // pred_region
          _
        $region36: #{tpu_custom_call.1} parent=11 // pred_fallthru
          _
        // Predicated region
        $region37: #{tpu_custom_call.1} parent=11 // pred_check
          %p293 = pneg %p192
        $region38: #{tpu_custom_call.1} parent=11 // pred_check_branch
          %295 = sbr.rel (%p293) target = $region40
        $region39: #{tpu_custom_call.1} parent=11 // pred_region
          _
        $region40: #{tpu_custom_call.1} parent=11 // pred_fallthru
          _
        // Predicated region
        $region41: #{tpu_custom_call.1} parent=11 // pred_check
          %p296 = pneg %p213
        $region42: #{tpu_custom_call.1} parent=11 // pred_check_branch
          %298 = sbr.rel (%p296) target = $region44
        $region43: #{tpu_custom_call.1} parent=11 // pred_region
          _
        $region44: #{tpu_custom_call.1} parent=11 // pred_fallthru
          _
        // Predicated region
        $region45: #{tpu_custom_call.1} parent=11 // pred_check
          %p299 = pneg %p234
        $region46: #{tpu_custom_call.1} parent=11 // pred_check_branch
          %301 = sbr.rel (%p299) target = $region48
        $region47: #{tpu_custom_call.1} parent=11 // pred_region
          _
        $region48: #{tpu_custom_call.1} parent=11 // pred_fallthru
          _
      $region12: #{tpu_custom_call.1} parent=5 // pred_fallthru
        _
      %p302 = scmp.lt.s32.totalorder %s19, 2
      // Predicated region
      $region49: #{tpu_custom_call.1} parent=5 // pred_check
        %p303 = pneg %p302
      $region50: #{tpu_custom_call.1} parent=5 // pred_check_branch
        %305 = sbr.rel (%p303) target = $region52
      $region51: #{tpu_custom_call.1} parent=5 // pred_region
        // Predicated region
        $region53: #{tpu_custom_call.1} parent=51 // pred_check
          %p306 = pneg %p39
        $region54: #{tpu_custom_call.1} parent=51 // pred_check_branch
          %308 = sbr.rel (%p306) target = $region56
        $region55: #{tpu_custom_call.1} parent=51 // pred_region
          %s309 = smul.u32 2, %s19
          %p310 = scmp.lt.s32.totalorder %s309, 3
          %s311 = scalar_select %p310, %s309, 3
          %s312 = smul.addr %s311, 4
          %s313 = smul.addr %s312, 4
          %s314 = scalar_lea.vmem %s0, %s313
          %s315 = smul.u32 2, %s19
        $region56: #{tpu_custom_call.1} parent=51 // pred_fallthru
          _
      $region52: #{tpu_custom_call.1} parent=5 // pred_fallthru
        _
      %p316 = scmp.le.s32.totalorder 1, %s19
      %p317 = scmp.lt.s32.totalorder %s19, 3
      %p318 = pnand %p316, %p317
      %p319 = pneg %p318
      // Predicated region
      $region57: #{tpu_custom_call.1} parent=5 // pred_check
        _
      $region58: #{tpu_custom_call.1} parent=5 // pred_check_branch
        %321 = sbr.rel (%p318) target = $region60
      $region59: #{tpu_custom_call.1} parent=5 // pred_region
        %s322 = ssub.s32 %s19, 1
        %s323 = smul.u32 2, %s24
        %p324 = scmp.lt.s32.totalorder %s323, 3
        %s325 = scalar_select %p324, %s323, 3
        %s326 = smul.addr %s325, 4
        %s327 = smul.addr %s326, 4
        %s328 = scalar_lea.vmem %s0, %s327
        %p329 = pneg %p45
        %p330 = pneg %p42
        %p331 = pneg %p66
        %p332 = pneg %p63
        %p333 = pneg %p87
        %p334 = pneg %p84
        %p335 = pneg %p108
        %p336 = pneg %p105
        %p337 = pneg %p129
        %p338 = pneg %p126
        %p339 = pneg %p150
        %p340 = pneg %p147
        %p341 = pneg %p171
        %p342 = pneg %p168
        %p343 = pneg %p192
        %p344 = pneg %p189
        %p345 = pneg %p213
        %p346 = pneg %p210
        %p347 = pneg %p234
        %p348 = pneg %p231
        %p349 = pneg %p260
        %p350 = pneg %p257
        %s351 = sand.u32 %s247, 1
        %s352 = scalar_lea.sflag [#allocation3], %s351
        %s353 = sand.u32 %s247, 1
        %s354 = smul.addr %s353, 16
        %s355 = scalar_lea.vmem [#allocation2], %s354
        %s356 = smul.u32 2, %s24
        %p357 = scmp.lt.s32.totalorder %s356, 3
        %s358 = scalar_select %p357, %s356, 3
        %s359 = smul.addr %s358, 4
        %s360 = smul.addr %s359, 4
        %s361 = scalar_lea.vmem %s0, %s360
        %s362 = smul.u32 2, %s24
        %s363 = smul.u32 2, %s24
        %v365 = vld [vmem:[%s361] sm:$0xff]
        %v366 = vld [vmem:[%s361 + $0x8] sm:$0xff]
        %v367 = vld [vmem:[%s361 + $0x10] sm:$0xff]
        %v368 = vld [vmem:[%s361 + $0x18] sm:$0xff]
        %v369 = vld [vmem:[%s1] sm:$0xf]
        %v370 = vld [vmem:[%s1 + $0x4] sm:$0xf]
        %v371 = vld [vmem:[%s1 + $0x8] sm:$0xf]
        %v372 = vld [vmem:[%s1 + $0xc] sm:$0xf]
        %v373 = vld [vmem:[%s1 + $0x10] sm:$0xf]
        %v374 = vld [vmem:[%s1 + $0x14] sm:$0xf]
        %v375 = vld [vmem:[%s1 + $0x18] sm:$0xf]
        %v376 = vld [vmem:[%s1 + $0x1c] sm:$0xf]
        %v377 = vld [vmem:[%s1 + $0x20] sm:$0xf]
        %v378 = vld [vmem:[%s1 + $0x24] sm:$0xf]
        %v379 = vld [vmem:[%s1 + $0x28] sm:$0xf]
        %v380 = vld [vmem:[%s1 + $0x2c] sm:$0xf]
        %v381 = vld [vmem:[%s1 + $0x30] sm:$0xf]
        %v382 = vld [vmem:[%s1 + $0x34] sm:$0xf]
        %v383 = vld [vmem:[%s1 + $0x38] sm:$0xf]
        %v384 = vld [vmem:[%s1 + $0x3c] sm:$0xf]
        %v385 = vld [vmem:[%s1 + $0x40] sm:$0xf]
        %v386 = vld [vmem:[%s1 + $0x44] sm:$0xf]
        %v387 = vld [vmem:[%s1 + $0x48] sm:$0xf]
        %v388 = vld [vmem:[%s1 + $0x4c] sm:$0xf]
        %v389 = vld [vmem:[%s1 + $0x50] sm:$0xf]
        %v390 = vld [vmem:[%s1 + $0x54] sm:$0xf]
        %v391 = vld [vmem:[%s1 + $0x58] sm:$0xf]
        %v392 = vld [vmem:[%s1 + $0x5c] sm:$0xf]
        %v393 = vld [vmem:[%s1 + $0x60] sm:$0xf]
        %v394 = vld [vmem:[%s1 + $0x64] sm:$0xf]
        %v395 = vld [vmem:[%s1 + $0x68] sm:$0xf]
        %v396 = vld [vmem:[%s1 + $0x6c] sm:$0xf]
        %v397 = vld [vmem:[%s1 + $0x70] sm:$0xf]
        %v398 = vld [vmem:[%s1 + $0x74] sm:$0xf]
        %v399 = vld [vmem:[%s1 + $0x78] sm:$0xf]
        %v400 = vld [vmem:[%s1 + $0x7c] sm:$0xf]
        %v401 = vld [vmem:[%s1 + $0x80] sm:$0xf]
        %v402 = vld [vmem:[%s1 + $0x84] sm:$0xf]
        %v403 = vld [vmem:[%s1 + $0x88] sm:$0xf]
        %v404 = vld [vmem:[%s1 + $0x8c] sm:$0xf]
        %v405 = vld [vmem:[%s1 + $0x90] sm:$0xf]
        %v406 = vld [vmem:[%s1 + $0x94] sm:$0xf]
        %v407 = vld [vmem:[%s1 + $0x98] sm:$0xf]
        %v408 = vld [vmem:[%s1 + $0x9c] sm:$0xf]
        %v409 = vld [vmem:[%s1 + $0xa0] sm:$0xf]
        %v410 = vld [vmem:[%s1 + $0xa4] sm:$0xf]
        %v411 = vld [vmem:[%s1 + $0xa8] sm:$0xf]
        %v412 = vld [vmem:[%s1 + $0xac] sm:$0xf]
        %v413 = vld [vmem:[%s1 + $0xb0] sm:$0xf]
        %v414 = vld [vmem:[%s1 + $0xb4] sm:$0xf]
        %v415 = vld [vmem:[%s1 + $0xb8] sm:$0xf]
        %v416 = vld [vmem:[%s1 + $0xbc] sm:$0xf]
        %v417 = vld [vmem:[%s1 + $0xc0] sm:$0xf]
        %v418 = vld [vmem:[%s1 + $0xc4] sm:$0xf]
        %v419 = vld [vmem:[%s1 + $0xc8] sm:$0xf]
        %v420 = vld [vmem:[%s1 + $0xcc] sm:$0xf]
        %v421 = vld [vmem:[%s1 + $0xd0] sm:$0xf]
        %v422 = vld [vmem:[%s1 + $0xd4] sm:$0xf]
        %v423 = vld [vmem:[%s1 + $0xd8] sm:$0xf]
        %v424 = vld [vmem:[%s1 + $0xdc] sm:$0xf]
        %v425 = vld [vmem:[%s1 + $0xe0] sm:$0xf]
        %v426 = vld [vmem:[%s1 + $0xe4] sm:$0xf]
        %v427 = vld [vmem:[%s1 + $0xe8] sm:$0xf]
        %v428 = vld [vmem:[%s1 + $0xec] sm:$0xf]
        %v429 = vld [vmem:[%s1 + $0xf0] sm:$0xf]
        %v430 = vld [vmem:[%s1 + $0xf4] sm:$0xf]
        %v431 = vld [vmem:[%s1 + $0xf8] sm:$0xf]
        %v432 = vld [vmem:[%s1 + $0xfc] sm:$0xf]
        %v433 = vld [vmem:[%s2] sm:$0x1]
        %v435 = vlaneseq
        %v436 = vshrl.u32 %v435, 7
        %v437 = vsub.s32 0, %v436
        %v438 = vrot.slane %v433, %v437
        %v444 = vunpack.c.l.b16 %v365
        %v445 = vunpack.c.h.b16 %v365
        %v446 = vunpack.c.l.b16 %v366
        %v447 = vunpack.c.h.b16 %v366
        %v448 = vunpack.c.l.b16 %v367
        %v449 = vunpack.c.h.b16 %v367
        %v450 = vunpack.c.l.b16 %v368
        %v451 = vunpack.c.h.b16 %v368
        %v452 = vpack.c.b16 %v448, %v444
        %v453 = vpack.c.b16 %v449, %v445
        %v454 = vpack.c.b16 %v450, %v446
        %v455 = vpack.c.b16 %v451, %v447
        %v524 = vunpack.c.l.b16 %v369
        %v525 = vunpack.c.l.b16 %v370
        %v526 = vunpack.c.l.b16 %v371
        %v527 = vunpack.c.l.b16 %v372
        %v528 = vunpack.c.l.b16 %v373
        %v529 = vunpack.c.l.b16 %v374
        %v530 = vunpack.c.l.b16 %v375
        %v531 = vunpack.c.l.b16 %v376
        %v532 = vunpack.c.l.b16 %v377
        %v533 = vunpack.c.l.b16 %v378
        %v534 = vunpack.c.l.b16 %v379
        %v535 = vunpack.c.l.b16 %v380
        %v536 = vunpack.c.l.b16 %v381
        %v537 = vunpack.c.l.b16 %v382
        %v538 = vunpack.c.l.b16 %v383
        %v539 = vunpack.c.l.b16 %v384
        %v540 = vunpack.c.l.b16 %v385
        %v541 = vunpack.c.l.b16 %v386
        %v542 = vunpack.c.l.b16 %v387
        %v543 = vunpack.c.l.b16 %v388
        %v544 = vunpack.c.l.b16 %v389
        %v545 = vunpack.c.l.b16 %v390
        %v546 = vunpack.c.l.b16 %v391
        %v547 = vunpack.c.l.b16 %v392
        %v548 = vunpack.c.l.b16 %v393
        %v549 = vunpack.c.l.b16 %v394
        %v550 = vunpack.c.l.b16 %v395
        %v551 = vunpack.c.l.b16 %v396
        %v552 = vunpack.c.l.b16 %v397
        %v553 = vunpack.c.l.b16 %v398
        %v554 = vunpack.c.l.b16 %v399
        %v555 = vunpack.c.l.b16 %v400
        %v556 = vunpack.c.l.b16 %v401
        %v557 = vunpack.c.l.b16 %v402
        %v558 = vunpack.c.l.b16 %v403
        %v559 = vunpack.c.l.b16 %v404
        %v560 = vunpack.c.l.b16 %v405
        %v561 = vunpack.c.l.b16 %v406
        %v562 = vunpack.c.l.b16 %v407
        %v563 = vunpack.c.l.b16 %v408
        %v564 = vunpack.c.l.b16 %v409
        %v565 = vunpack.c.l.b16 %v410
        %v566 = vunpack.c.l.b16 %v411
        %v567 = vunpack.c.l.b16 %v412
        %v568 = vunpack.c.l.b16 %v413
        %v569 = vunpack.c.l.b16 %v414
        %v570 = vunpack.c.l.b16 %v415
        %v571 = vunpack.c.l.b16 %v416
        %v572 = vunpack.c.l.b16 %v417
        %v573 = vunpack.c.l.b16 %v418
        %v574 = vunpack.c.l.b16 %v419
        %v575 = vunpack.c.l.b16 %v420
        %v576 = vunpack.c.l.b16 %v421
        %v577 = vunpack.c.l.b16 %v422
        %v578 = vunpack.c.l.b16 %v423
        %v579 = vunpack.c.l.b16 %v424
        %v580 = vunpack.c.l.b16 %v425
        %v581 = vunpack.c.l.b16 %v426
        %v582 = vunpack.c.l.b16 %v427
        %v583 = vunpack.c.l.b16 %v428
        %v584 = vunpack.c.l.b16 %v429
        %v585 = vunpack.c.l.b16 %v430
        %v586 = vunpack.c.l.b16 %v431
        %v587 = vunpack.c.l.b16 %v432
        %v588 = vpack.c.b16 %v525, %v524
        %v589 = vpack.c.b16 %v527, %v526
        %v590 = vpack.c.b16 %v529, %v528
        %v591 = vpack.c.b16 %v531, %v530
        %v592 = vpack.c.b16 %v533, %v532
        %v593 = vpack.c.b16 %v535, %v534
        %v594 = vpack.c.b16 %v537, %v536
        %v595 = vpack.c.b16 %v539, %v538
        %v596 = vpack.c.b16 %v541, %v540
        %v597 = vpack.c.b16 %v543, %v542
        %v598 = vpack.c.b16 %v545, %v544
        %v599 = vpack.c.b16 %v547, %v546
        %v600 = vpack.c.b16 %v549, %v548
        %v601 = vpack.c.b16 %v551, %v550
        %v602 = vpack.c.b16 %v553, %v552
        %v603 = vpack.c.b16 %v555, %v554
        %v604 = vpack.c.b16 %v557, %v556
        %v605 = vpack.c.b16 %v559, %v558
        %v606 = vpack.c.b16 %v561, %v560
        %v607 = vpack.c.b16 %v563, %v562
        %v608 = vpack.c.b16 %v565, %v564
        %v609 = vpack.c.b16 %v567, %v566
        %v610 = vpack.c.b16 %v569, %v568
        %v611 = vpack.c.b16 %v571, %v570
        %v612 = vpack.c.b16 %v573, %v572
        %v613 = vpack.c.b16 %v575, %v574
        %v614 = vpack.c.b16 %v577, %v576
        %v615 = vpack.c.b16 %v579, %v578
        %v616 = vpack.c.b16 %v581, %v580
        %v617 = vpack.c.b16 %v583, %v582
        %v618 = vpack.c.b16 %v585, %v584
        %v619 = vpack.c.b16 %v587, %v586
        %652 = vmatprep.subr.bf16.mxu0 0
        %653 = vmatpush1.bf16.msra.mxu0 %v595
        %654 = vmatprep.subr.bf16.mxu0 0
        %655 = vmatpush1.bf16.msra.mxu0 %v594
        %656 = vmatprep.subr.bf16.mxu0 0
        %657 = vmatpush1.bf16.msra.mxu0 %v593
        %658 = vmatprep.subr.bf16.mxu0 0
        %659 = vmatpush1.bf16.msra.mxu0 %v592
        %660 = vmatprep.subr.bf16.mxu0 0
        %661 = vmatpush1.bf16.msra.mxu0 %v591
        %662 = vmatprep.subr.bf16.mxu0 0
        %663 = vmatpush1.bf16.msra.mxu0 %v590
        %664 = vmatprep.subr.bf16.mxu0 0
        %665 = vmatpush1.bf16.msra.mxu0 %v589
        %666 = vmatprep.subr.bf16.mxu0 0
        %667 = vmatpush1.bf16.msra.mxu0 %v588
        %668 = vmatprep.subr.bf16.mxu0 0
        %669 = vmatpush2.bf16.msra.mxu0 %v603
        %670 = vmatprep.subr.bf16.mxu0 0
        %671 = vmatpush2.bf16.msra.mxu0 %v602
        %672 = vmatprep.subr.bf16.mxu0 0
        %673 = vmatpush2.bf16.msra.mxu0 %v601
        %674 = vmatprep.subr.bf16.mxu0 0
        %675 = vmatpush2.bf16.msra.mxu0 %v600
        %676 = vmatprep.subr.bf16.mxu0 0
        %677 = vmatpush2.bf16.msra.mxu0 %v599
        %678 = vmatprep.subr.bf16.mxu0 0
        %679 = vmatpush2.bf16.msra.mxu0 %v598
        %680 = vmatprep.subr.bf16.mxu0 0
        %681 = vmatpush2.bf16.msra.mxu0 %v597
        %682 = vmatprep.subr.bf16.mxu0 0
        %683 = vmatpush2.bf16.msra.mxu0 %v596
        %684 = vmatprep.mubr.bf16.mxu0 %v453
        %685 = vmatmul.mubr.bf16.gmra.mxu0 %v452
        %v686 = vpop.f32.mrf.mxu0
        %v687 = vadd.f32 %v438, %v686
        %v688 = vpop.f32.mrf.mxu0
        %v689 = vpop.f32.mrf.mxu0
        %v690 = vadd.f32 %v438, %v689
        %v691 = vpop.f32.mrf.mxu0
        %692 = vdwg.mxu0
        %693 = vmatprep.subr.bf16.mxu0 0
        %694 = vmatpush1.bf16.msra.mxu0 %v611
        %695 = vmatprep.subr.bf16.mxu0 0
        %696 = vmatpush1.bf16.msra.mxu0 %v610
        %697 = vmatprep.subr.bf16.mxu0 0
        %698 = vmatpush1.bf16.msra.mxu0 %v609
        %699 = vmatprep.subr.bf16.mxu0 0
        %700 = vmatpush1.bf16.msra.mxu0 %v608
        %701 = vmatprep.subr.bf16.mxu0 0
        %702 = vmatpush1.bf16.msra.mxu0 %v607
        %703 = vmatprep.subr.bf16.mxu0 0
        %704 = vmatpush1.bf16.msra.mxu0 %v606
        %705 = vmatprep.subr.bf16.mxu0 0
        %706 = vmatpush1.bf16.msra.mxu0 %v605
        %707 = vmatprep.subr.bf16.mxu0 0
        %708 = vmatpush1.bf16.msra.mxu0 %v604
        %709 = vmatprep.subr.bf16.mxu0 0
        %710 = vmatpush2.bf16.msra.mxu0 %v619
        %711 = vmatprep.subr.bf16.mxu0 0
        %712 = vmatpush2.bf16.msra.mxu0 %v618
        %713 = vmatprep.subr.bf16.mxu0 0
        %714 = vmatpush2.bf16.msra.mxu0 %v617
        %715 = vmatprep.subr.bf16.mxu0 0
        %716 = vmatpush2.bf16.msra.mxu0 %v616
        %717 = vmatprep.subr.bf16.mxu0 0
        %718 = vmatpush2.bf16.msra.mxu0 %v615
        %719 = vmatprep.subr.bf16.mxu0 0
        %720 = vmatpush2.bf16.msra.mxu0 %v614
        %721 = vmatprep.subr.bf16.mxu0 0
        %722 = vmatpush2.bf16.msra.mxu0 %v613
        %723 = vmatprep.subr.bf16.mxu0 0
        %724 = vmatpush2.bf16.msra.mxu0 %v612
        %725 = vmatprep.mubr.bf16.mxu0 %v455
        %726 = vmatmul.mubr.bf16.gmra.mxu0 %v454
        %v727 = vpop.f32.mrf.mxu0
        %v728 = vadd.f32 %v687, %v727
        %v729 = vpop.f32.mrf.mxu0
        %v730 = vpop.f32.mrf.mxu0
        %v731 = vadd.f32 %v690, %v730
        %v732 = vpop.f32.mrf.mxu0
        %733 = vdwg.mxu0
        %v734 = vmax.f32 %v728, 0.0
        %v735 = vmax.f32 %v731, 0.0
        %v736 = vpack.c.bf16 %v735, %v734
        %v737 = vld [vmem:[%s3] sm:$0xf]
        %v738 = vld [vmem:[%s3 + $0x4] sm:$0xf]
        %v739 = vld [vmem:[%s3 + $0x8] sm:$0xf]
        %v740 = vld [vmem:[%s3 + $0xc] sm:$0xf]
        %v741 = vld [vmem:[%s3 + $0x10] sm:$0xf]
        %v742 = vld [vmem:[%s3 + $0x14] sm:$0xf]
        %v743 = vld [vmem:[%s3 + $0x18] sm:$0xf]
        %v744 = vld [vmem:[%s3 + $0x1c] sm:$0xf]
        %v745 = vld [vmem:[%s4] sm:$0x1]
        %v747 = vlaneseq
        %v748 = vshrl.u32 %v747, 7
        %v749 = vsub.s32 0, %v748
        %v750 = vrot.slane %v745, %v749
        %v760 = vunpack.c.l.b16 %v737
        %v761 = vunpack.c.l.b16 %v738
        %v762 = vunpack.c.l.b16 %v739
        %v763 = vunpack.c.l.b16 %v740
        %v764 = vunpack.c.l.b16 %v741
        %v765 = vunpack.c.l.b16 %v742
        %v766 = vunpack.c.l.b16 %v743
        %v767 = vunpack.c.l.b16 %v744
        %v768 = vpack.c.b16 %v761, %v760
        %v769 = vpack.c.b16 %v763, %v762
        %v770 = vpack.c.b16 %v765, %v764
        %v771 = vpack.c.b16 %v767, %v766
        %vm776 = vcmask 523264
        %v778 = vsel %vm776, %v736, 0
        %780 = vmatprep.subr.bf16.mxu0 0
        %781 = vmatpush1.bf16.msra.mxu0 0
        %782 = vmatprep.subr.bf16.mxu0 0
        %783 = vmatpush1.bf16.msra.mxu0 0
        %784 = vmatprep.subr.bf16.mxu0 0
        %785 = vmatpush1.bf16.msra.mxu0 0
        %786 = vmatprep.subr.bf16.mxu0 0
        %787 = vmatpush1.bf16.msra.mxu0 0
        %788 = vmatprep.subr.bf16.mxu0 0
        %789 = vmatpush1.bf16.msra.mxu0 %v771
        %790 = vmatprep.subr.bf16.mxu0 0
        %791 = vmatpush1.bf16.msra.mxu0 %v770
        %792 = vmatprep.subr.bf16.mxu0 0
        %793 = vmatpush1.bf16.msra.mxu0 %v769
        %794 = vmatprep.subr.bf16.mxu0 0
        %795 = vmatpush1.bf16.msra.mxu0 %v768
        %796 = vmatprep.subr.bf16.mxu0 0
        %797 = vmatpush2.bf16.msra.mxu0 0
        %798 = vmatprep.subr.bf16.mxu0 0
        %799 = vmatpush2.bf16.msra.mxu0 0
        %800 = vmatprep.subr.bf16.mxu0 0
        %801 = vmatpush2.bf16.msra.mxu0 0
        %802 = vmatprep.subr.bf16.mxu0 0
        %803 = vmatpush2.bf16.msra.mxu0 0
        %804 = vmatprep.subr.bf16.mxu0 0
        %805 = vmatpush2.bf16.msra.mxu0 0
        %806 = vmatprep.subr.bf16.mxu0 0
        %807 = vmatpush2.bf16.msra.mxu0 0
        %808 = vmatprep.subr.bf16.mxu0 0
        %809 = vmatpush2.bf16.msra.mxu0 0
        %810 = vmatprep.subr.bf16.mxu0 0
        %811 = vmatpush2.bf16.msra.mxu0 0
        %812 = vmatprep.mubr.bf16.mxu0 0
        %813 = vmatmul.mubr.bf16.gmra.mxu0 %v778
        %v814 = vpop.f32.mrf.mxu0
        %v815 = vadd.f32 %v750, %v814
        %v816 = vpop.f32.mrf.mxu0
        %v817 = vpop.f32.mrf.mxu0
        %v818 = vadd.f32 %v750, %v817
        %v819 = vpop.f32.mrf.mxu0
        %820 = vdwg.mxu0
        %v821 = vxor.u32 %v815, 2147483648
        %v822 = vxor.u32 %v818, 2147483648
        %v823 = vmul.f32 %v821, 1.442695
        %v824 = vpow.pop %v823
        %v825 = vmul.f32 %v822, 1.442695
        %v826 = vpow.pop %v825
        %v827 = vadd.f32 %v824, 1.0
        %v828 = vadd.f32 %v826, 1.0
        %v829 = vrcp.pop %v827
        %v830 = vmul.f32 1.0, %v829
        %v831 = vrcp.pop %v828
        %v832 = vmul.f32 1.0, %v831
        %v833 = vld [vmem:[%s5] sm:$0xff]
        %v834 = vld [vmem:[%s5 + $0x8] sm:$0xff]
        %v835 = vld [vmem:[%s5 + $0x10] sm:$0xff]
        %v836 = vld [vmem:[%s5 + $0x18] sm:$0xff]
        %vm837 = vcmask 64512
        %v839 = vsel %vm837, %v830, 0
        %v842 = vsel %vm837, %v832, 0
        %844 = vmatprep.subr.mxu0 0.0
        %845 = vmatpush1.msra.mxu0 0.0
        %846 = vmatprep.subr.mxu0 0.0
        %847 = vmatpush1.msra.mxu0 0.0
        %848 = vmatprep.subr.mxu0 0.0
        %849 = vmatpush1.msra.mxu0 0.0
        %850 = vmatprep.subr.mxu0 0.0
        %851 = vmatpush1.msra.mxu0 0.0
        %852 = vmatprep.subr.mxu0 0.0
        %853 = vmatpush1.msra.mxu0 0.0
        %854 = vmatprep.subr.mxu0 0.0
        %855 = vmatpush1.msra.mxu0 0.0
        %856 = vmatprep.subr.mxu0 0.0
        %857 = vmatpush1.msra.mxu0 0.0
        %858 = vmatprep.subr.mxu0 0.0
        %859 = vmatpush1.msra.mxu0 0.0
        %860 = vmatprep.subr.mxu0 0.0
        %861 = vmatpush1.msra.mxu0 0.0
        %862 = vmatprep.subr.mxu0 0.0
        %863 = vmatpush1.msra.mxu0 0.0
        %864 = vmatprep.subr.mxu0 0.0
        %865 = vmatpush1.msra.mxu0 0.0
        %866 = vmatprep.subr.mxu0 0.0
        %867 = vmatpush1.msra.mxu0 0.0
        %868 = vmatprep.subr.mxu0 0.0
        %869 = vmatpush1.msra.mxu0 0.0
        %870 = vmatprep.subr.mxu0 0.0
        %871 = vmatpush1.msra.mxu0 0.0
        %872 = vmatprep.subr.mxu0 0.0
        %873 = vmatpush1.msra.mxu0 0.0
        %874 = vmatprep.subr.mxu0 %v834
        %875 = vmatpush1.msra.mxu0 %v833
        %876 = vmatprep.subr.mxu0 0.0
        %877 = vmatpush2.msra.mxu0 0.0
        %878 = vmatprep.subr.mxu0 0.0
        %879 = vmatpush2.msra.mxu0 0.0
        %880 = vmatprep.subr.mxu0 0.0
        %881 = vmatpush2.msra.mxu0 0.0
        %882 = vmatprep.subr.mxu0 0.0
        %883 = vmatpush2.msra.mxu0 0.0
        %884 = vmatprep.subr.mxu0 0.0
        %885 = vmatpush2.msra.mxu0 0.0
        %886 = vmatprep.subr.mxu0 0.0
        %887 = vmatpush2.msra.mxu0 0.0
        %888 = vmatprep.subr.mxu0 0.0
        %889 = vmatpush2.msra.mxu0 0.0
        %890 = vmatprep.subr.mxu0 0.0
        %891 = vmatpush2.msra.mxu0 0.0
        %892 = vmatprep.subr.mxu0 0.0
        %893 = vmatpush2.msra.mxu0 0.0
        %894 = vmatprep.subr.mxu0 0.0
        %895 = vmatpush2.msra.mxu0 0.0
        %896 = vmatprep.subr.mxu0 0.0
        %897 = vmatpush2.msra.mxu0 0.0
        %898 = vmatprep.subr.mxu0 0.0
        %899 = vmatpush2.msra.mxu0 0.0
        %900 = vmatprep.subr.mxu0 0.0
        %901 = vmatpush2.msra.mxu0 0.0
        %902 = vmatprep.subr.mxu0 0.0
        %903 = vmatpush2.msra.mxu0 0.0
        %904 = vmatprep.subr.mxu0 0.0
        %905 = vmatpush2.msra.mxu0 0.0
        %906 = vmatprep.subr.mxu0 0.0
        %907 = vmatpush2.msra.mxu0 0.0
        %908 = vmatprep.mubr.f32.mxu0 0.0
        %909 = vmatmul.mubr.f32.gmra.mxu0 %v839
        %v910 = vpop.f32.mrf.mxu0
        %v911 = vadd.f32 0.0, %v910
        %v912 = vpop.f32.mrf.mxu0
        %v913 = vadd.f32 0.0, %v912
        %914 = vmatprep.mubr.f32.mxu0 0.0
        %915 = vmatmul.mubr.f32.gmra.mxu0 %v842
        %v916 = vpop.f32.mrf.mxu0
        %v917 = vadd.f32 0.0, %v916
        %v918 = vpop.f32.mrf.mxu0
        %v919 = vadd.f32 0.0, %v918
        %920 = vdwg.mxu0
        %921 = vmatprep.subr.mxu0 0.0
        %922 = vmatpush1.msra.mxu0 0.0
        %923 = vmatprep.subr.mxu0 0.0
        %924 = vmatpush1.msra.mxu0 0.0
        %925 = vmatprep.subr.mxu0 0.0
        %926 = vmatpush1.msra.mxu0 0.0
        %927 = vmatprep.subr.mxu0 0.0
        %928 = vmatpush1.msra.mxu0 0.0
        %929 = vmatprep.subr.mxu0 0.0
        %930 = vmatpush1.msra.mxu0 0.0
        %931 = vmatprep.subr.mxu0 0.0
        %932 = vmatpush1.msra.mxu0 0.0
        %933 = vmatprep.subr.mxu0 0.0
        %934 = vmatpush1.msra.mxu0 0.0
        %935 = vmatprep.subr.mxu0 0.0
        %936 = vmatpush1.msra.mxu0 0.0
        %937 = vmatprep.subr.mxu0 0.0
        %938 = vmatpush1.msra.mxu0 0.0
        %939 = vmatprep.subr.mxu0 0.0
        %940 = vmatpush1.msra.mxu0 0.0
        %941 = vmatprep.subr.mxu0 0.0
        %942 = vmatpush1.msra.mxu0 0.0
        %943 = vmatprep.subr.mxu0 0.0
        %944 = vmatpush1.msra.mxu0 0.0
        %945 = vmatprep.subr.mxu0 0.0
        %946 = vmatpush1.msra.mxu0 0.0
        %947 = vmatprep.subr.mxu0 0.0
        %948 = vmatpush1.msra.mxu0 0.0
        %949 = vmatprep.subr.mxu0 0.0
        %950 = vmatpush1.msra.mxu0 0.0
        %951 = vmatprep.subr.mxu0 %v836
        %952 = vmatpush1.msra.mxu0 %v835
        %953 = vmatprep.subr.mxu0 0.0
        %954 = vmatpush2.msra.mxu0 0.0
        %955 = vmatprep.subr.mxu0 0.0
        %956 = vmatpush2.msra.mxu0 0.0
        %957 = vmatprep.subr.mxu0 0.0
        %958 = vmatpush2.msra.mxu0 0.0
        %959 = vmatprep.subr.mxu0 0.0
        %960 = vmatpush2.msra.mxu0 0.0
        %961 = vmatprep.subr.mxu0 0.0
        %962 = vmatpush2.msra.mxu0 0.0
        %963 = vmatprep.subr.mxu0 0.0
        %964 = vmatpush2.msra.mxu0 0.0
        %965 = vmatprep.subr.mxu0 0.0
        %966 = vmatpush2.msra.mxu0 0.0
        %967 = vmatprep.subr.mxu0 0.0
        %968 = vmatpush2.msra.mxu0 0.0
        %969 = vmatprep.subr.mxu0 0.0
        %970 = vmatpush2.msra.mxu0 0.0
        %971 = vmatprep.subr.mxu0 0.0
        %972 = vmatpush2.msra.mxu0 0.0
        %973 = vmatprep.subr.mxu0 0.0
        %974 = vmatpush2.msra.mxu0 0.0
        %975 = vmatprep.subr.mxu0 0.0
        %976 = vmatpush2.msra.mxu0 0.0
        %977 = vmatprep.subr.mxu0 0.0
        %978 = vmatpush2.msra.mxu0 0.0
        %979 = vmatprep.subr.mxu0 0.0
        %980 = vmatpush2.msra.mxu0 0.0
        %981 = vmatprep.subr.mxu0 0.0
        %982 = vmatpush2.msra.mxu0 0.0
        %983 = vmatprep.subr.mxu0 0.0
        %984 = vmatpush2.msra.mxu0 0.0
        %985 = vmatprep.mubr.f32.mxu0 0.0
        %986 = vmatmul.mubr.f32.gmra.mxu0 %v839
        %v987 = vpop.f32.mrf.mxu0
        %v988 = vadd.f32 0.0, %v987
        %v989 = vpop.f32.mrf.mxu0
        %v990 = vadd.f32 0.0, %v989
        %991 = vmatprep.mubr.f32.mxu0 0.0
        %992 = vmatmul.mubr.f32.gmra.mxu0 %v842
        %v993 = vpop.f32.mrf.mxu0
        %v994 = vadd.f32 0.0, %v993
        %v995 = vpop.f32.mrf.mxu0
        %v996 = vadd.f32 0.0, %v995
        %997 = vdwg.mxu0
        %v998 = vunpack.c.l.bf16 %v365
        %v999 = vunpack.c.h.bf16 %v365
        %v1000 = vunpack.c.l.bf16 %v366
        %v1001 = vunpack.c.h.bf16 %v366
        %v1002 = vunpack.c.l.bf16 %v367
        %v1003 = vunpack.c.h.bf16 %v367
        %v1004 = vunpack.c.l.bf16 %v368
        %v1005 = vunpack.c.h.bf16 %v368
        %v1006 = vmul.f32 %v998, %v911
        %v1007 = vmul.f32 %v999, %v913
        %v1008 = vmul.f32 %v1000, %v988
        %v1009 = vmul.f32 %v1001, %v990
        %v1010 = vmul.f32 %v1002, %v917
        %v1011 = vmul.f32 %v1003, %v919
        %v1012 = vmul.f32 %v1004, %v994
        %v1013 = vmul.f32 %v1005, %v996
        %v1014 = vld [vmem:[%s6] sm:$0xf]
        %v1015 = vld [vmem:[%s6 + $0x4] sm:$0xf]
        %v1016 = vld [vmem:[%s6 + $0x8] sm:$0xf]
        %v1017 = vld [vmem:[%s6 + $0xc] sm:$0xf]
        %v1018 = vld [vmem:[%s6 + $0x10] sm:$0xf]
        %v1019 = vld [vmem:[%s6 + $0x14] sm:$0xf]
        %v1020 = vld [vmem:[%s6 + $0x18] sm:$0xf]
        %v1021 = vld [vmem:[%s6 + $0x1c] sm:$0xf]
        %v1022 = vld [vmem:[%s6 + $0x20] sm:$0xf]
        %v1023 = vld [vmem:[%s6 + $0x24] sm:$0xf]
        %v1024 = vld [vmem:[%s6 + $0x28] sm:$0xf]
        %v1025 = vld [vmem:[%s6 + $0x2c] sm:$0xf]
        %v1026 = vld [vmem:[%s6 + $0x30] sm:$0xf]
        %v1027 = vld [vmem:[%s6 + $0x34] sm:$0xf]
        %v1028 = vld [vmem:[%s6 + $0x38] sm:$0xf]
        %v1029 = vld [vmem:[%s6 + $0x3c] sm:$0xf]
        %v1030 = vld [vmem:[%s6 + $0x40] sm:$0xf]
        %v1031 = vld [vmem:[%s6 + $0x44] sm:$0xf]
        %v1032 = vld [vmem:[%s6 + $0x48] sm:$0xf]
        %v1033 = vld [vmem:[%s6 + $0x4c] sm:$0xf]
        %v1034 = vld [vmem:[%s6 + $0x50] sm:$0xf]
        %v1035 = vld [vmem:[%s6 + $0x54] sm:$0xf]
        %v1036 = vld [vmem:[%s6 + $0x58] sm:$0xf]
        %v1037 = vld [vmem:[%s6 + $0x5c] sm:$0xf]
        %v1038 = vld [vmem:[%s6 + $0x60] sm:$0xf]
        %v1039 = vld [vmem:[%s6 + $0x64] sm:$0xf]
        %v1040 = vld [vmem:[%s6 + $0x68] sm:$0xf]
        %v1041 = vld [vmem:[%s6 + $0x6c] sm:$0xf]
        %v1042 = vld [vmem:[%s6 + $0x70] sm:$0xf]
        %v1043 = vld [vmem:[%s6 + $0x74] sm:$0xf]
        %v1044 = vld [vmem:[%s6 + $0x78] sm:$0xf]
        %v1045 = vld [vmem:[%s6 + $0x7c] sm:$0xf]
        %v1046 = vld [vmem:[%s6 + $0x80] sm:$0xf]
        %v1047 = vld [vmem:[%s6 + $0x84] sm:$0xf]
        %v1048 = vld [vmem:[%s6 + $0x88] sm:$0xf]
        %v1049 = vld [vmem:[%s6 + $0x8c] sm:$0xf]
        %v1050 = vld [vmem:[%s6 + $0x90] sm:$0xf]
        %v1051 = vld [vmem:[%s6 + $0x94] sm:$0xf]
        %v1052 = vld [vmem:[%s6 + $0x98] sm:$0xf]
        %v1053 = vld [vmem:[%s6 + $0x9c] sm:$0xf]
        %v1054 = vld [vmem:[%s6 + $0xa0] sm:$0xf]
        %v1055 = vld [vmem:[%s6 + $0xa4] sm:$0xf]
        %v1056 = vld [vmem:[%s6 + $0xa8] sm:$0xf]
        %v1057 = vld [vmem:[%s6 + $0xac] sm:$0xf]
        %v1058 = vld [vmem:[%s6 + $0xb0] sm:$0xf]
        %v1059 = vld [vmem:[%s6 + $0xb4] sm:$0xf]
        %v1060 = vld [vmem:[%s6 + $0xb8] sm:$0xf]
        %v1061 = vld [vmem:[%s6 + $0xbc] sm:$0xf]
        %v1062 = vld [vmem:[%s6 + $0xc0] sm:$0xf]
        %v1063 = vld [vmem:[%s6 + $0xc4] sm:$0xf]
        %v1064 = vld [vmem:[%s6 + $0xc8] sm:$0xf]
        %v1065 = vld [vmem:[%s6 + $0xcc] sm:$0xf]
        %v1066 = vld [vmem:[%s6 + $0xd0] sm:$0xf]
        %v1067 = vld [vmem:[%s6 + $0xd4] sm:$0xf]
        %v1068 = vld [vmem:[%s6 + $0xd8] sm:$0xf]
        %v1069 = vld [vmem:[%s6 + $0xdc] sm:$0xf]
        %v1070 = vld [vmem:[%s6 + $0xe0] sm:$0xf]
        %v1071 = vld [vmem:[%s6 + $0xe4] sm:$0xf]
        %v1072 = vld [vmem:[%s6 + $0xe8] sm:$0xf]
        %v1073 = vld [vmem:[%s6 + $0xec] sm:$0xf]
        %v1074 = vld [vmem:[%s6 + $0xf0] sm:$0xf]
        %v1075 = vld [vmem:[%s6 + $0xf4] sm:$0xf]
        %v1076 = vld [vmem:[%s6 + $0xf8] sm:$0xf]
        %v1077 = vld [vmem:[%s6 + $0xfc] sm:$0xf]
        %v1142 = vunpack.c.l.b16 %v1014
        %v1143 = vunpack.c.l.b16 %v1015
        %v1144 = vunpack.c.l.b16 %v1016
        %v1145 = vunpack.c.l.b16 %v1017
        %v1146 = vunpack.c.l.b16 %v1018
        %v1147 = vunpack.c.l.b16 %v1019
        %v1148 = vunpack.c.l.b16 %v1020
        %v1149 = vunpack.c.l.b16 %v1021
        %v1150 = vunpack.c.l.b16 %v1022
        %v1151 = vunpack.c.l.b16 %v1023
        %v1152 = vunpack.c.l.b16 %v1024
        %v1153 = vunpack.c.l.b16 %v1025
        %v1154 = vunpack.c.l.b16 %v1026
        %v1155 = vunpack.c.l.b16 %v1027
        %v1156 = vunpack.c.l.b16 %v1028
        %v1157 = vunpack.c.l.b16 %v1029
        %v1158 = vunpack.c.l.b16 %v1030
        %v1159 = vunpack.c.l.b16 %v1031
        %v1160 = vunpack.c.l.b16 %v1032
        %v1161 = vunpack.c.l.b16 %v1033
        %v1162 = vunpack.c.l.b16 %v1034
        %v1163 = vunpack.c.l.b16 %v1035
        %v1164 = vunpack.c.l.b16 %v1036
        %v1165 = vunpack.c.l.b16 %v1037
        %v1166 = vunpack.c.l.b16 %v1038
        %v1167 = vunpack.c.l.b16 %v1039
        %v1168 = vunpack.c.l.b16 %v1040
        %v1169 = vunpack.c.l.b16 %v1041
        %v1170 = vunpack.c.l.b16 %v1042
        %v1171 = vunpack.c.l.b16 %v1043
        %v1172 = vunpack.c.l.b16 %v1044
        %v1173 = vunpack.c.l.b16 %v1045
        %v1174 = vunpack.c.l.b16 %v1046
        %v1175 = vunpack.c.l.b16 %v1047
        %v1176 = vunpack.c.l.b16 %v1048
        %v1177 = vunpack.c.l.b16 %v1049
        %v1178 = vunpack.c.l.b16 %v1050
        %v1179 = vunpack.c.l.b16 %v1051
        %v1180 = vunpack.c.l.b16 %v1052
        %v1181 = vunpack.c.l.b16 %v1053
        %v1182 = vunpack.c.l.b16 %v1054
        %v1183 = vunpack.c.l.b16 %v1055
        %v1184 = vunpack.c.l.b16 %v1056
        %v1185 = vunpack.c.l.b16 %v1057
        %v1186 = vunpack.c.l.b16 %v1058
        %v1187 = vunpack.c.l.b16 %v1059
        %v1188 = vunpack.c.l.b16 %v1060
        %v1189 = vunpack.c.l.b16 %v1061
        %v1190 = vunpack.c.l.b16 %v1062
        %v1191 = vunpack.c.l.b16 %v1063
        %v1192 = vunpack.c.l.b16 %v1064
        %v1193 = vunpack.c.l.b16 %v1065
        %v1194 = vunpack.c.l.b16 %v1066
        %v1195 = vunpack.c.l.b16 %v1067
        %v1196 = vunpack.c.l.b16 %v1068
        %v1197 = vunpack.c.l.b16 %v1069
        %v1198 = vunpack.c.l.b16 %v1070
        %v1199 = vunpack.c.l.b16 %v1071
        %v1200 = vunpack.c.l.b16 %v1072
        %v1201 = vunpack.c.l.b16 %v1073
        %v1202 = vunpack.c.l.b16 %v1074
        %v1203 = vunpack.c.l.b16 %v1075
        %v1204 = vunpack.c.l.b16 %v1076
        %v1205 = vunpack.c.l.b16 %v1077
        %v1206 = vpack.c.b16 %v1143, %v1142
        %v1207 = vpack.c.b16 %v1145, %v1144
        %v1208 = vpack.c.b16 %v1147, %v1146
        %v1209 = vpack.c.b16 %v1149, %v1148
        %v1210 = vpack.c.b16 %v1151, %v1150
        %v1211 = vpack.c.b16 %v1153, %v1152
        %v1212 = vpack.c.b16 %v1155, %v1154
        %v1213 = vpack.c.b16 %v1157, %v1156
        %v1214 = vpack.c.b16 %v1159, %v1158
        %v1215 = vpack.c.b16 %v1161, %v1160
        %v1216 = vpack.c.b16 %v1163, %v1162
        %v1217 = vpack.c.b16 %v1165, %v1164
        %v1218 = vpack.c.b16 %v1167, %v1166
        %v1219 = vpack.c.b16 %v1169, %v1168
        %v1220 = vpack.c.b16 %v1171, %v1170
        %v1221 = vpack.c.b16 %v1173, %v1172
        %v1222 = vpack.c.b16 %v1175, %v1174
        %v1223 = vpack.c.b16 %v1177, %v1176
        %v1224 = vpack.c.b16 %v1179, %v1178
        %v1225 = vpack.c.b16 %v1181, %v1180
        %v1226 = vpack.c.b16 %v1183, %v1182
        %v1227 = vpack.c.b16 %v1185, %v1184
        %v1228 = vpack.c.b16 %v1187, %v1186
        %v1229 = vpack.c.b16 %v1189, %v1188
        %v1230 = vpack.c.b16 %v1191, %v1190
        %v1231 = vpack.c.b16 %v1193, %v1192
        %v1232 = vpack.c.b16 %v1195, %v1194
        %v1233 = vpack.c.b16 %v1197, %v1196
        %v1234 = vpack.c.b16 %v1199, %v1198
        %v1235 = vpack.c.b16 %v1201, %v1200
        %v1236 = vpack.c.b16 %v1203, %v1202
        %v1237 = vpack.c.b16 %v1205, %v1204
        %1270 = vmatprep.subr.bf16.mxu0 0
        %1271 = vmatpush1.bf16.msra.mxu0 %v1213
        %1272 = vmatprep.subr.bf16.mxu0 0
        %1273 = vmatpush1.bf16.msra.mxu0 %v1212
        %1274 = vmatprep.subr.bf16.mxu0 0
        %1275 = vmatpush1.bf16.msra.mxu0 %v1211
        %1276 = vmatprep.subr.bf16.mxu0 0
        %1277 = vmatpush1.bf16.msra.mxu0 %v1210
        %1278 = vmatprep.subr.bf16.mxu0 0
        %1279 = vmatpush1.bf16.msra.mxu0 %v1209
        %1280 = vmatprep.subr.bf16.mxu0 0
        %1281 = vmatpush1.bf16.msra.mxu0 %v1208
        %1282 = vmatprep.subr.bf16.mxu0 0
        %1283 = vmatpush1.bf16.msra.mxu0 %v1207
        %1284 = vmatprep.subr.bf16.mxu0 0
        %1285 = vmatpush1.bf16.msra.mxu0 %v1206
        %1286 = vmatprep.subr.bf16.mxu0 0
        %1287 = vmatpush2.bf16.msra.mxu0 %v1221
        %1288 = vmatprep.subr.bf16.mxu0 0
        %1289 = vmatpush2.bf16.msra.mxu0 %v1220
        %1290 = vmatprep.subr.bf16.mxu0 0
        %1291 = vmatpush2.bf16.msra.mxu0 %v1219
        %1292 = vmatprep.subr.bf16.mxu0 0
        %1293 = vmatpush2.bf16.msra.mxu0 %v1218
        %1294 = vmatprep.subr.bf16.mxu0 0
        %1295 = vmatpush2.bf16.msra.mxu0 %v1217
        %1296 = vmatprep.subr.bf16.mxu0 0
        %1297 = vmatpush2.bf16.msra.mxu0 %v1216
        %1298 = vmatprep.subr.bf16.mxu0 0
        %1299 = vmatpush2.bf16.msra.mxu0 %v1215
        %1300 = vmatprep.subr.bf16.mxu0 0
        %1301 = vmatpush2.bf16.msra.mxu0 %v1214
        %1302 = vmatprep.mubr.bf16.mxu0 %v453
        %1303 = vmatmul.mubr.bf16.gmra.mxu0 %v452
        %v1304 = vpop.f32.mrf.mxu0
        %v1305 = vadd.f32 0.0, %v1304
        %v1306 = vpop.f32.mrf.mxu0
        %v1307 = vpop.f32.mrf.mxu0
        %v1308 = vadd.f32 0.0, %v1307
        %v1309 = vpop.f32.mrf.mxu0
        %1310 = vdwg.mxu0
        %1311 = vmatprep.subr.bf16.mxu0 0
        %1312 = vmatpush1.bf16.msra.mxu0 %v1229
        %1313 = vmatprep.subr.bf16.mxu0 0
        %1314 = vmatpush1.bf16.msra.mxu0 %v1228
        %1315 = vmatprep.subr.bf16.mxu0 0
        %1316 = vmatpush1.bf16.msra.mxu0 %v1227
        %1317 = vmatprep.subr.bf16.mxu0 0
        %1318 = vmatpush1.bf16.msra.mxu0 %v1226
        %1319 = vmatprep.subr.bf16.mxu0 0
        %1320 = vmatpush1.bf16.msra.mxu0 %v1225
        %1321 = vmatprep.subr.bf16.mxu0 0
        %1322 = vmatpush1.bf16.msra.mxu0 %v1224
        %1323 = vmatprep.subr.bf16.mxu0 0
        %1324 = vmatpush1.bf16.msra.mxu0 %v1223
        %1325 = vmatprep.subr.bf16.mxu0 0
        %1326 = vmatpush1.bf16.msra.mxu0 %v1222
        %1327 = vmatprep.subr.bf16.mxu0 0
        %1328 = vmatpush2.bf16.msra.mxu0 %v1237
        %1329 = vmatprep.subr.bf16.mxu0 0
        %1330 = vmatpush2.bf16.msra.mxu0 %v1236
        %1331 = vmatprep.subr.bf16.mxu0 0
        %1332 = vmatpush2.bf16.msra.mxu0 %v1235
        %1333 = vmatprep.subr.bf16.mxu0 0
        %1334 = vmatpush2.bf16.msra.mxu0 %v1234
        %1335 = vmatprep.subr.bf16.mxu0 0
        %1336 = vmatpush2.bf16.msra.mxu0 %v1233
        %1337 = vmatprep.subr.bf16.mxu0 0
        %1338 = vmatpush2.bf16.msra.mxu0 %v1232
        %1339 = vmatprep.subr.bf16.mxu0 0
        %1340 = vmatpush2.bf16.msra.mxu0 %v1231
        %1341 = vmatprep.subr.bf16.mxu0 0
        %1342 = vmatpush2.bf16.msra.mxu0 %v1230
        %1343 = vmatprep.mubr.bf16.mxu0 %v455
        %1344 = vmatmul.mubr.bf16.gmra.mxu0 %v454
        %v1345 = vpop.f32.mrf.mxu0
        %v1346 = vadd.f32 %v1305, %v1345
        %v1347 = vpop.f32.mrf.mxu0
        %v1348 = vpop.f32.mrf.mxu0
        %v1349 = vadd.f32 %v1308, %v1348
        %v1350 = vpop.f32.mrf.mxu0
        %1351 = vdwg.mxu0
        %v1352 = vpack.c.bf16 %v1010, %v1006
        %v1353 = vpack.c.bf16 %v1011, %v1007
        %v1354 = vpack.c.bf16 %v1012, %v1008
        %v1355 = vpack.c.bf16 %v1013, %v1009
        %1356 = vmatprep.subr.bf16.mxu0 0
        %1357 = vmatpush1.bf16.msra.mxu0 %v1213
        %1358 = vmatprep.subr.bf16.mxu0 0
        %1359 = vmatpush1.bf16.msra.mxu0 %v1212
        %1360 = vmatprep.subr.bf16.mxu0 0
        %1361 = vmatpush1.bf16.msra.mxu0 %v1211
        %1362 = vmatprep.subr.bf16.mxu0 0
        %1363 = vmatpush1.bf16.msra.mxu0 %v1210
        %1364 = vmatprep.subr.bf16.mxu0 0
        %1365 = vmatpush1.bf16.msra.mxu0 %v1209
        %1366 = vmatprep.subr.bf16.mxu0 0
        %1367 = vmatpush1.bf16.msra.mxu0 %v1208
        %1368 = vmatprep.subr.bf16.mxu0 0
        %1369 = vmatpush1.bf16.msra.mxu0 %v1207
        %1370 = vmatprep.subr.bf16.mxu0 0
        %1371 = vmatpush1.bf16.msra.mxu0 %v1206
        %1372 = vmatprep.subr.bf16.mxu0 0
        %1373 = vmatpush2.bf16.msra.mxu0 %v1221
        %1374 = vmatprep.subr.bf16.mxu0 0
        %1375 = vmatpush2.bf16.msra.mxu0 %v1220
        %1376 = vmatprep.subr.bf16.mxu0 0
        %1377 = vmatpush2.bf16.msra.mxu0 %v1219
        %1378 = vmatprep.subr.bf16.mxu0 0
        %1379 = vmatpush2.bf16.msra.mxu0 %v1218
        %1380 = vmatprep.subr.bf16.mxu0 0
        %1381 = vmatpush2.bf16.msra.mxu0 %v1217
        %1382 = vmatprep.subr.bf16.mxu0 0
        %1383 = vmatpush2.bf16.msra.mxu0 %v1216
        %1384 = vmatprep.subr.bf16.mxu0 0
        %1385 = vmatpush2.bf16.msra.mxu0 %v1215
        %1386 = vmatprep.subr.bf16.mxu0 0
        %1387 = vmatpush2.bf16.msra.mxu0 %v1214
        %1388 = vmatprep.mubr.bf16.mxu0 %v1353
        %1389 = vmatmul.mubr.bf16.gmra.mxu0 %v1352
        %v1390 = vpop.f32.mrf.mxu0
        %v1391 = vadd.f32 0.0, %v1390
        %v1392 = vpop.f32.mrf.mxu0
        %v1393 = vpop.f32.mrf.mxu0
        %v1394 = vadd.f32 0.0, %v1393
        %v1395 = vpop.f32.mrf.mxu0
        %1396 = vdwg.mxu0
        %1397 = vmatprep.subr.bf16.mxu0 0
        %1398 = vmatpush1.bf16.msra.mxu0 %v1229
        %1399 = vmatprep.subr.bf16.mxu0 0
        %1400 = vmatpush1.bf16.msra.mxu0 %v1228
        %1401 = vmatprep.subr.bf16.mxu0 0
        %1402 = vmatpush1.bf16.msra.mxu0 %v1227
        %1403 = vmatprep.subr.bf16.mxu0 0
        %1404 = vmatpush1.bf16.msra.mxu0 %v1226
        %1405 = vmatprep.subr.bf16.mxu0 0
        %1406 = vmatpush1.bf16.msra.mxu0 %v1225
        %1407 = vmatprep.subr.bf16.mxu0 0
        %1408 = vmatpush1.bf16.msra.mxu0 %v1224
        %1409 = vmatprep.subr.bf16.mxu0 0
        %1410 = vmatpush1.bf16.msra.mxu0 %v1223
        %1411 = vmatprep.subr.bf16.mxu0 0
        %1412 = vmatpush1.bf16.msra.mxu0 %v1222
        %1413 = vmatprep.subr.bf16.mxu0 0
        %1414 = vmatpush2.bf16.msra.mxu0 %v1237
        %1415 = vmatprep.subr.bf16.mxu0 0
        %1416 = vmatpush2.bf16.msra.mxu0 %v1236
        %1417 = vmatprep.subr.bf16.mxu0 0
        %1418 = vmatpush2.bf16.msra.mxu0 %v1235
        %1419 = vmatprep.subr.bf16.mxu0 0
        %1420 = vmatpush2.bf16.msra.mxu0 %v1234
        %1421 = vmatprep.subr.bf16.mxu0 0
        %1422 = vmatpush2.bf16.msra.mxu0 %v1233
        %1423 = vmatprep.subr.bf16.mxu0 0
        %1424 = vmatpush2.bf16.msra.mxu0 %v1232
        %1425 = vmatprep.subr.bf16.mxu0 0
        %1426 = vmatpush2.bf16.msra.mxu0 %v1231
        %1427 = vmatprep.subr.bf16.mxu0 0
        %1428 = vmatpush2.bf16.msra.mxu0 %v1230
        %1429 = vmatprep.mubr.bf16.mxu0 %v1355
        %1430 = vmatmul.mubr.bf16.gmra.mxu0 %v1354
        %v1431 = vpop.f32.mrf.mxu0
        %v1432 = vadd.f32 %v1391, %v1431
        %v1433 = vpop.f32.mrf.mxu0
        %v1434 = vpop.f32.mrf.mxu0
        %v1435 = vadd.f32 %v1394, %v1434
        %v1436 = vpop.f32.mrf.mxu0
        %1437 = vdwg.mxu0
        %v1438 = vld [vmem:[%s7] sm:$0x1]
        %v1440 = vlaneseq
        %v1441 = vshrl.u32 %v1440, 7
        %v1442 = vsub.s32 0, %v1441
        %v1443 = vrot.slane %v1438, %v1442
        %v1445 = vadd.f32 %v1432, %v1443
        %v1446 = vadd.f32 %v1435, %v1443
        %v1447 = vmax.f32 %v1445, 0.0
        %v1448 = vmax.f32 %v1446, 0.0
        %v1449 = vsub.f32 %v1346, %v1432
        %v1450 = vsub.f32 %v1349, %v1435
        %v1451 = vadd.f32 %v1449, %v1443
        %v1452 = vadd.f32 %v1450, %v1443
        %v1453 = vmax.f32 %v1451, 0.0
        %v1454 = vmax.f32 %v1452, 0.0
        %v1455 = vpack.c.bf16 %v1448, %v1447
        %v1456 = vld [vmem:[%s8] sm:$0xf]
        %v1457 = vld [vmem:[%s8 + $0x4] sm:$0xf]
        %v1458 = vld [vmem:[%s8 + $0x8] sm:$0xf]
        %v1459 = vld [vmem:[%s8 + $0xc] sm:$0xf]
        %v1460 = vld [vmem:[%s8 + $0x10] sm:$0xf]
        %v1461 = vld [vmem:[%s8 + $0x14] sm:$0xf]
        %v1462 = vld [vmem:[%s8 + $0x18] sm:$0xf]
        %v1463 = vld [vmem:[%s8 + $0x1c] sm:$0xf]
        %v1464 = vld [vmem:[%s9] sm:$0x1]
        %v1466 = vlaneseq
        %v1467 = vshrl.u32 %v1466, 7
        %v1468 = vsub.s32 0, %v1467
        %v1469 = vrot.slane %v1464, %v1468
        %v1479 = vunpack.c.l.b16 %v1456
        %v1480 = vunpack.c.l.b16 %v1457
        %v1481 = vunpack.c.l.b16 %v1458
        %v1482 = vunpack.c.l.b16 %v1459
        %v1483 = vunpack.c.l.b16 %v1460
        %v1484 = vunpack.c.l.b16 %v1461
        %v1485 = vunpack.c.l.b16 %v1462
        %v1486 = vunpack.c.l.b16 %v1463
        %v1487 = vpack.c.b16 %v1480, %v1479
        %v1488 = vpack.c.b16 %v1482, %v1481
        %v1489 = vpack.c.b16 %v1484, %v1483
        %v1490 = vpack.c.b16 %v1486, %v1485
        %v1496 = vsel %vm776, %v1455, 0
        %1498 = vmatprep.subr.bf16.mxu0 0
        %1499 = vmatpush1.bf16.msra.mxu0 0
        %1500 = vmatprep.subr.bf16.mxu0 0
        %1501 = vmatpush1.bf16.msra.mxu0 0
        %1502 = vmatprep.subr.bf16.mxu0 0
        %1503 = vmatpush1.bf16.msra.mxu0 0
        %1504 = vmatprep.subr.bf16.mxu0 0
        %1505 = vmatpush1.bf16.msra.mxu0 0
        %1506 = vmatprep.subr.bf16.mxu0 0
        %1507 = vmatpush1.bf16.msra.mxu0 %v1490
        %1508 = vmatprep.subr.bf16.mxu0 0
        %1509 = vmatpush1.bf16.msra.mxu0 %v1489
        %1510 = vmatprep.subr.bf16.mxu0 0
        %1511 = vmatpush1.bf16.msra.mxu0 %v1488
        %1512 = vmatprep.subr.bf16.mxu0 0
        %1513 = vmatpush1.bf16.msra.mxu0 %v1487
        %1514 = vmatprep.subr.bf16.mxu0 0
        %1515 = vmatpush2.bf16.msra.mxu0 0
        %1516 = vmatprep.subr.bf16.mxu0 0
        %1517 = vmatpush2.bf16.msra.mxu0 0
        %1518 = vmatprep.subr.bf16.mxu0 0
        %1519 = vmatpush2.bf16.msra.mxu0 0
        %1520 = vmatprep.subr.bf16.mxu0 0
        %1521 = vmatpush2.bf16.msra.mxu0 0
        %1522 = vmatprep.subr.bf16.mxu0 0
        %1523 = vmatpush2.bf16.msra.mxu0 0
        %1524 = vmatprep.subr.bf16.mxu0 0
        %1525 = vmatpush2.bf16.msra.mxu0 0
        %1526 = vmatprep.subr.bf16.mxu0 0
        %1527 = vmatpush2.bf16.msra.mxu0 0
        %1528 = vmatprep.subr.bf16.mxu0 0
        %1529 = vmatpush2.bf16.msra.mxu0 0
        %1530 = vmatprep.mubr.bf16.mxu0 0
        %1531 = vmatmul.mubr.bf16.gmra.mxu0 %v1496
        %v1532 = vpop.f32.mrf.mxu0
        %v1533 = vadd.f32 %v1469, %v1532
        %v1534 = vpop.f32.mrf.mxu0
        %v1535 = vpop.f32.mrf.mxu0
        %v1536 = vadd.f32 %v1469, %v1535
        %v1537 = vpop.f32.mrf.mxu0
        %1538 = vdwg.mxu0
        %v1539 = vpack.c.bf16 %v1454, %v1453
        %v1541 = vsel %vm776, %v1539, 0
        %1543 = vmatprep.subr.bf16.mxu0 0
        %1544 = vmatpush1.bf16.msra.mxu0 0
        %1545 = vmatprep.subr.bf16.mxu0 0
        %1546 = vmatpush1.bf16.msra.mxu0 0
        %1547 = vmatprep.subr.bf16.mxu0 0
        %1548 = vmatpush1.bf16.msra.mxu0 0
        %1549 = vmatprep.subr.bf16.mxu0 0
        %1550 = vmatpush1.bf16.msra.mxu0 0
        %1551 = vmatprep.subr.bf16.mxu0 0
        %1552 = vmatpush1.bf16.msra.mxu0 %v1490
        %1553 = vmatprep.subr.bf16.mxu0 0
        %1554 = vmatpush1.bf16.msra.mxu0 %v1489
        %1555 = vmatprep.subr.bf16.mxu0 0
        %1556 = vmatpush1.bf16.msra.mxu0 %v1488
        %1557 = vmatprep.subr.bf16.mxu0 0
        %1558 = vmatpush1.bf16.msra.mxu0 %v1487
        %1559 = vmatprep.subr.bf16.mxu0 0
        %1560 = vmatpush2.bf16.msra.mxu0 0
        %1561 = vmatprep.subr.bf16.mxu0 0
        %1562 = vmatpush2.bf16.msra.mxu0 0
        %1563 = vmatprep.subr.bf16.mxu0 0
        %1564 = vmatpush2.bf16.msra.mxu0 0
        %1565 = vmatprep.subr.bf16.mxu0 0
        %1566 = vmatpush2.bf16.msra.mxu0 0
        %1567 = vmatprep.subr.bf16.mxu0 0
        %1568 = vmatpush2.bf16.msra.mxu0 0
        %1569 = vmatprep.subr.bf16.mxu0 0
        %1570 = vmatpush2.bf16.msra.mxu0 0
        %1571 = vmatprep.subr.bf16.mxu0 0
        %1572 = vmatpush2.bf16.msra.mxu0 0
        %1573 = vmatprep.subr.bf16.mxu0 0
        %1574 = vmatpush2.bf16.msra.mxu0 0
        %1575 = vmatprep.mubr.bf16.mxu0 0
        %1576 = vmatmul.mubr.bf16.gmra.mxu0 %v1541
        %v1577 = vpop.f32.mrf.mxu0
        %v1578 = vadd.f32 %v1469, %v1577
        %v1579 = vpop.f32.mrf.mxu0
        %v1580 = vpop.f32.mrf.mxu0
        %v1581 = vadd.f32 %v1469, %v1580
        %v1582 = vpop.f32.mrf.mxu0
        %1583 = vdwg.mxu0
        %vm1584 = vcmask 261120
        %1585 = vst.msk [vmem:[%s355] sm:$0xff] %vm1584, %v1533
        %1586 = vst.msk [vmem:[%s355 + $0x8] sm:$0xff] %vm1584, %v1536
        %1589 = vrot.lane.b32.xlu0 %v1578, 32
        %v1590 = vpop.permute.xlu0 %1589
        %1591 = vrot.lane.b32.xlu0 %v1581, 32
        %v1592 = vpop.permute.xlu0 %1591
        %vm1595 = vcmask 523520
        %1596 = vst.msk [vmem:[%s355] sm:$0xff] %vm1595, %v1590
        %1597 = vst.msk [vmem:[%s355 + $0x8] sm:$0xff] %vm1595, %v1592
        %s1598 = sand.u32 %s247, 1
        %s1599 = scalar_lea.sflag [#allocation3], %s1598
        %s1600 = sand.u32 %s247, 1
        %s1601 = smul.addr %s1600, 16
        %s1602 = scalar_lea.vmem [#allocation2], %s1601
        // Predicated region
        $region61: #{tpu_custom_call.1} parent=59 // pred_check
          %p1603 = pneg %p257
        $region62: #{tpu_custom_call.1} parent=59 // pred_check_branch
          %1605 = sbr.rel (%p1603) target = $region64
        $region63: #{tpu_custom_call.1} parent=59 // pred_region
          %s1606 = smul.u32 2, %s24
          %s1608 = ssub.s32 256, 256
          %1609 = vsyncadd %s1599, %s1608
          %s1610 = smul.addr %s1606, 128
          %s1611 = scalar_lea.hbm %s10, %s1610
          %s1612 = sshll.u32 %s1602, 4
          %s1613 = int_to_ptr.vmem [resolvable:$true] %s1612
          %1618 = dma.vmem_to_hbm [thread:$0]  %s1613, 256, %s1611, %s1599, 128, 128, 8
        $region64: #{tpu_custom_call.1} parent=59 // pred_fallthru
          _
      $region60: #{tpu_custom_call.1} parent=5 // pred_fallthru
        _
      %p1619 = scmp.le.s32.totalorder 2, %s19
      // Predicated region
      $region65: #{tpu_custom_call.1} parent=5 // pred_check
        %p1620 = pneg %p1619
      $region66: #{tpu_custom_call.1} parent=5 // pred_check_branch
        %1622 = sbr.rel (%p1620) target = $region68
      $region67: #{tpu_custom_call.1} parent=5 // pred_region
        %s1623 = ssub.s32 %s19, 2
        // Predicated region
        $region69: #{tpu_custom_call.1} parent=67 // pred_check
          %p1624 = pneg %p263
        $region70: #{tpu_custom_call.1} parent=67 // pred_check_branch
          %1626 = sbr.rel (%p1624) target = $region72
        $region71: #{tpu_custom_call.1} parent=67 // pred_region
          %s1627 = sand.u32 %s248, 1
          %s1628 = scalar_lea.sflag [#allocation3], %s1627
          %s1629 = sand.u32 %s248, 1
          %s1630 = smul.addr %s1629, 16
          %s1631 = scalar_lea.vmem [#allocation2], %s1630
          %1632 = dma.done %s1628, 256
        $region72: #{tpu_custom_call.1} parent=67 // pred_fallthru
          _
      $region68: #{tpu_custom_call.1} parent=5 // pred_fallthru
        _
    $region6: #{tpu_custom_call.1} parent=1 // loop_footer
      %s23 = sadd.s32 1, %s19
    $region7: #{tpu_custom_call.1} parent=1 // loop_footer_branch
      %18 = sbr.rel target = $region3
    $region8: #{tpu_custom_call.1} parent=1 // loop_exit
      _
    %1633 = vsyncpa [#allocation3], 1
    %s1634 = scalar_lea.sflag [#allocation3], 1
    %1635 = vsyncpa %s1634, 1

</llo_original>
